<compile_context>
chip_gen: v6e
topology: v6e:2x2x1
jax: 0.10.0
libtpu: 0.0.40
codegen_flags: <defaults>
</compile_context>

<pallas_src>
import math

import jax
import jax.numpy as jnp
from jax import lax
from jax.experimental import pallas as pl
from jax.experimental.pallas import tpu as pltpu


# ----------------------------------------------------------------------------
# glue: sinusoidal positional embedding (tiny scalar math, kept outside kernel)
# ----------------------------------------------------------------------------
def sinusoidal_pos_emb(t, num_steps, dim, rescale=4):
    x = t / num_steps * num_steps * rescale
    half_dim = dim // 2
    emb = math.log(10000) / (half_dim - 1)
    emb = jnp.exp(jnp.arange(half_dim, dtype=jnp.float32) * -emb)
    emb = x[:, None] * emb[None, :]
    return jnp.concatenate([jnp.sin(emb), jnp.cos(emb)], axis=-1)  # (1, dim)


# ----------------------------------------------------------------------------
# Pallas kernel
# ----------------------------------------------------------------------------
# vec slab (f32, (24, 128)) row layout:
#   0: [w_em | 0]          1: [0 | w_emo]         2: [b_em | b_emo]
#   3: w_le1 (as row)      4: w_n1                5: b_n1
#   6: b_le2               7: b_n2                8: b_le3
#   9: b_n3               10: b_t2               11: b_d1[:128]
#  12: b_d1[128:256]      13: w_d1[256, :128]    14: w_d1[256, 128:256]
#  15: w_d1[:128, 256]    16: w_d1[128:256, 256] 17: w_d2[:128, 0]
#  18: w_d2[128:256, 0]   19..23: zero padding
#
# mat slab (bf16, (1280, 128)), 128-row tiles:
#   tiles 0-1: w_t2 (256,128)   tile 2: w_le2   tile 3: w_n2
#   tile 4: w_le3               tile 5: w_n3
#   tiles 6-7: w_d1[:256, :128]      (contiguous 256-deep block)
#   tiles 8-9: w_d1[:256, 128:256]   (contiguous 256-deep block)
#
# SMEM scalars (f32, (8,)):
#   0: b_le1   1: w_d1[256,256]   2: b_d1[256]   3: w_d2[256,0]   4: b_d2
def _denoise_kernel(x_ref, ea_ref, qy_ref, temb_ref, vec_ref, wt1_ref, bt1_ref,
                    mat_ref, src_ref, tgt_ref, sc_ref, out_ref,
                    h_ref, agg_ref, elin_ref, h1_ref, h2_ref):
    f32 = jnp.float32
    bf16 = jnp.bfloat16
    N = h_ref.shape[0]
    E = elin_ref.shape[0]

    def row(i):                        # (1, 128) f32 parameter row
        return vec_ref[i:i + 1, :]

    def tile(i):                       # (128, 128) bf16 parameter tile
        return mat_ref[i * 128:(i + 1) * 128, :]

    x = x_ref[...]                     # (N, 1) f32
    ea = ea_ref[...]                   # (E, 1) f32
    qy = qy_ref[...]                   # (E, 1) f32

    # ---- edge embedding cat([edge_map(ea), edge_map_opt(qy)]): VPU outer
    #      products straight into one 128-lane slab (no concat, no MXU).
    ee = ea * row(0) + qy * row(1) + row(2)                          # (E,128) f32
    # conv1 edge-lin (Linear(128,1)) as an f32 lane reduction, done before the
    # f32 copy of ee goes dead; only ee_b stays live for conv2/conv3.
    e1 = jnp.sum(ee * row(3), axis=-1, keepdims=True) + sc_ref[0]    # (E, 1)
    ee_b = ee.astype(bf16)                                           # hoisted cast

    # ---- time MLP on a single row (all node rows are identical)
    t_h = jnp.maximum(
        jnp.dot(temb_ref[...].astype(bf16), wt1_ref[...],
                preferred_element_type=f32) + bt1_ref[...], 0.0)     # (1,256)
    t_mlp = jnp.dot(t_h.astype(bf16), mat_ref[0:256, :],
                    preferred_element_type=f32) + row(10)            # (1,128)

    # ---- index-based message passing: per-edge gather of h[src], relu message,
    #      scatter-add into an (N,128) f32 accumulator.  Exact f32, no one-hots.
    def propagate():
        agg_ref[...] = jnp.zeros_like(agg_ref)

        def body(e, carry):
            s = src_ref[e]
            t = tgt_ref[e]
            msg = jnp.maximum(
                h_ref[pl.ds(s, 1), :] + elin_ref[pl.ds(e, 1), :], 0.0)
            agg_ref[pl.ds(t, 1), :] = agg_ref[pl.ds(t, 1), :] + msg
            return carry

        lax.fori_loop(0, E, body, 0)

    # ---- conv1 (node feature width 1): run the same per-edge loop on
    #      lane-broadcast scalars; nn (Linear(1,128)) is a VPU row multiply.
    h_ref[...] = jnp.broadcast_to(x, (N, 128))
    elin_ref[...] = jnp.broadcast_to(e1, (E, 128))
    propagate()
    h_ref[...] = (agg_ref[...] + h_ref[...]) * row(4) + row(5) + t_mlp

    # ---- conv2 / conv3 (full 128-wide GINEConv, eps = 0)
    def gine(w_le_tile, b_le_row, w_nn_tile, b_nn_row):
        elin_ref[...] = (jnp.dot(ee_b, tile(w_le_tile),
                                 preferred_element_type=f32) + b_le_row)
        propagate()
        h_prev = h_ref[...]
        h_ref[...] = (jnp.dot((agg_ref[...] + h_prev).astype(bf16),
                              tile(w_nn_tile), preferred_element_type=f32)
                      + b_nn_row + t_mlp)

    gine(2, row(6), 3, row(7))
    gine(4, row(8), 5, row(9))

    # ---- decode: gather h[src], h[tgt] per edge, then Linear(257,257)+ReLU+
    #      Linear(257,1).  The two 128-wide halves are fused into K=256 dots;
    #      the q_Y column / final contraction stay on the VPU as lane-sums.
    def gather_pairs(e, carry):
        h1_ref[pl.ds(e, 1), :] = h_ref[pl.ds(src_ref[e], 1), :]
        h2_ref[pl.ds(e, 1), :] = h_ref[pl.ds(tgt_ref[e], 1), :]
        return carry

    lax.fori_loop(0, E, gather_pairs, 0)

    h1 = h1_ref[...]                                                 # (E,128) f32
    h2 = h2_ref[...]                                                 # (E,128) f32
    h12_b = jnp.concatenate([h1, h2], axis=-1).astype(bf16)          # (E,256) bf16

    d_a = (jnp.dot(h12_b, mat_ref[768:1024, :], preferred_element_type=f32)
           + qy * row(13) + row(11))
    d_b = (jnp.dot(h12_b, mat_ref[1024:1280, :], preferred_element_type=f32)
           + qy * row(14) + row(12))
    d_c = (jnp.sum(h1 * row(15), axis=-1, keepdims=True)
           + jnp.sum(h2 * row(16), axis=-1, keepdims=True)
           + qy * sc_ref[1] + sc_ref[2])

    d_a = jnp.maximum(d_a, 0.0)
    d_b = jnp.maximum(d_b, 0.0)
    d_c = jnp.maximum(d_c, 0.0)

    out = (jnp.sum(d_a * row(17), axis=-1, keepdims=True)
           + jnp.sum(d_b * row(18), axis=-1, keepdims=True)
           + d_c * sc_ref[3] + sc_ref[4])                            # (E, 1)

    # TODO(synk): at large E, pack 128 edge scalars per lane-dense output row
    # instead of the narrow (E,1) masked store.
    out_ref[...] = out


# ----------------------------------------------------------------------------
# parameters (deterministic synthetic init; weights stored as (in, out))
# ----------------------------------------------------------------------------
_PARAM_SHAPES = {
    "w_em": (1, 64), "b_em": (1, 64),
    "w_emo": (1, 64), "b_emo": (1, 64),
    "w_t1": (128, 256), "b_t1": (1, 256),
    "w_t2": (256, 128), "b_t2": (1, 128),
    "w_le1": (128, 1), "b_le1": (1, 1),
    "w_n1": (1, 128), "b_n1": (1, 128),
    "w_le2": (128, 128), "b_le2": (1, 128),
    "w_n2": (128, 128), "b_n2": (1, 128),
    "w_le3": (128, 128), "b_le3": (1, 128),
    "w_n3": (128, 128), "b_n3": (1, 128),
    "w_d1": (257, 257), "b_d1": (1, 257),
    "w_d2": (257, 1), "b_d2": (1, 1),
}


def init_params(key):
    params = {}
    keys = jax.random.split(key, len(_PARAM_SHAPES))
    for k, (name, shape) in zip(keys, _PARAM_SHAPES.items()):
        params[name] = 0.1 * jax.random.normal(k, shape, jnp.float32)
    return params


def _pack_params(p):
    """Pack the ~30 small tensors into a few DMA-friendly slabs."""
    f32, bf16 = jnp.float32, jnp.bfloat16
    w_d1, w_d2 = p["w_d1"], p["w_d2"]

    rows = [
        jnp.pad(p["w_em"].reshape(-1), (0, 64)),                       # 0
        jnp.pad(p["w_emo"].reshape(-1), (64, 0)),                      # 1
        jnp.concatenate([p["b_em"].reshape(-1),
                         p["b_emo"].reshape(-1)]),                     # 2
        p["w_le1"].reshape(-1),                                        # 3
        p["w_n1"].reshape(-1),                                         # 4
        p["b_n1"].reshape(-1),                                         # 5
        p["b_le2"].reshape(-1),                                        # 6
        p["b_n2"].reshape(-1),                                         # 7
        p["b_le3"].reshape(-1),                                        # 8
        p["b_n3"].reshape(-1),                                         # 9
        p["b_t2"].reshape(-1),                                         # 10
        p["b_d1"].reshape(-1)[:128],                                   # 11
        p["b_d1"].reshape(-1)[128:256],                                # 12
        w_d1[256, :128],                                               # 13
        w_d1[256, 128:256],                                            # 14
        w_d1[:128, 256],                                               # 15
        w_d1[128:256, 256],                                            # 16
        w_d2[:128, 0],                                                 # 17
        w_d2[128:256, 0],                                              # 18
    ]
    vec = jnp.stack([r.astype(f32) for r in rows])                     # (19,128)
    vec = jnp.pad(vec, ((0, 24 - vec.shape[0]), (0, 0)))               # (24,128)

    mat = jnp.concatenate([
        p["w_t2"],                        # tiles 0-1
        p["w_le2"], p["w_n2"],            # tiles 2-3
        p["w_le3"], p["w_n3"],            # tiles 4-5
        w_d1[:256, :128],                 # tiles 6-7  (K=256 decoder block A)
        w_d1[:256, 128:256],              # tiles 8-9  (K=256 decoder block B)
    ], axis=0).astype(bf16)                                            # (1280,128)

    scalars = jnp.array([
        p["b_le1"][0, 0], w_d1[256, 256], p["b_d1"][0, 256],
        w_d2[256, 0], p["b_d2"][0, 0], 0.0, 0.0, 0.0,
    ], dtype=f32)                                                      # (8,)

    wt1 = p["w_t1"].astype(bf16)                                       # (128,256)
    bt1 = p["b_t1"].astype(f32)                                        # (1,256)
    return vec, wt1, bt1, mat, scalars


# ----------------------------------------------------------------------------
# wrapper
# ----------------------------------------------------------------------------
def denoising_forward(x, edge_attr, q_Y_sample, adj, t, num_steps, p):
    E = adj.shape[1]
    N = x.shape[0]
    temb = sinusoidal_pos_emb(t, num_steps, 128)                       # (1,128)
    vec, wt1, bt1, mat, scalars = _pack_params(p)
    src_idx = adj[0].astype(jnp.int32)                                 # (E,)
    tgt_idx = adj[1].astype(jnp.int32)                                 # (E,)

    vmem = pl.BlockSpec(memory_space=pltpu.MemorySpace.VMEM)
    smem = pl.BlockSpec(memory_space=pltpu.MemorySpace.SMEM)

    # Per-generation VMEM budget: physical capacity minus headroom for compiler
    # scratch / double buffers, capped at ~100 MiB (v5e/v6e have 128 MiB, v7x 64).
    try:
        cap = int(pltpu.get_tpu_info().vmem_capacity_bytes)
    except Exception:
        cap = 64 * 1024 * 1024
    vmem_limit = max(min(cap - (16 << 20), 100 << 20), 32 << 20)

    f32 = jnp.float32
    out = pl.pallas_call(
        _denoise_kernel,
        out_shape=jax.ShapeDtypeStruct((E, 1), f32),
        in_specs=[vmem] * 8 + [smem] * 3,
        out_specs=vmem,
        scratch_shapes=[
            pltpu.VMEM((N, 128), f32),   # h   (node features, f32 resident)
            pltpu.VMEM((N, 128), f32),   # agg (scatter-add accumulator)
            pltpu.VMEM((E, 128), f32),   # elin (per-edge linear of edge embed)
            pltpu.VMEM((E, 128), f32),   # h1 = h[adj[0]]
            pltpu.VMEM((E, 128), f32),   # h2 = h[adj[1]]
        ],
        compiler_params=pltpu.CompilerParams(vmem_limit_bytes=vmem_limit),
    )(x, edge_attr, q_Y_sample, temb, vec, wt1, bt1, mat,
      src_idx, tgt_idx, scalars)
    return out


# ----------------------------------------------------------------------------
# pure-JAX reference (mirrors PyTorch / PyG semantics) for a sanity check
# ----------------------------------------------------------------------------
def reference_forward(x, edge_attr, q_Y_sample, adj, t, num_steps, p):
    def lin(v, w, b):
        return v @ w + b

    N = x.shape[0]
    edge_embed = jnp.concatenate(
        [lin(edge_attr, p["w_em"], p["b_em"]),
         lin(q_Y_sample, p["w_emo"], p["b_emo"])], axis=-1)
    temb = sinusoidal_pos_emb(t, num_steps, 128)
    temb = jnp.broadcast_to(temb.reshape(1, -1), (N, 128))
    t_mlp = lin(jax.nn.relu(lin(temb, p["w_t1"], p["b_t1"])), p["w_t2"], p["b_t2"])

    src, tgt = adj[0], adj[1]

    def gine(h, wle, ble, wnn, bnn):
        e = lin(edge_embed, wle, ble)
        msg = jax.nn.relu(h[src] + e)
        agg = jnp.zeros((N, msg.shape[1]), jnp.float32).at[tgt].add(msg)
        return lin(agg + h, wnn, bnn)

    h = gine(x, p["w_le1"], p["b_le1"], p["w_n1"], p["b_n1"]) + t_mlp
    h = gine(h, p["w_le2"], p["b_le2"], p["w_n2"], p["b_n2"]) + t_mlp
    h = gine(h, p["w_le3"], p["b_le3"], p["w_n3"], p["b_n3"]) + t_mlp

    dec_in = jnp.concatenate([h[src], h[tgt], q_Y_sample], axis=-1)
    d = jax.nn.relu(lin(dec_in, p["w_d1"], p["b_d1"]))
    return lin(d, p["w_d2"], p["b_d2"])


if __name__ == "__main__":
    key = jax.random.PRNGKey(0)
    kx, ke, kq, ka, kp = jax.random.split(key, 5)

    N, E, num_steps = 8, 16, 1000
    x = jax.random.normal(kx, (N, 1), jnp.float32)            # node features
    edge_attr = jax.random.normal(ke, (E, 1), jnp.float32)    # edge features
    q_Y_sample = jax.random.normal(kq, (E, 1), jnp.float32)   # noisy edge labels
    adj = jax.random.randint(ka, (2, E), 0, N, jnp.int32)     # edge_index
    t = jnp.array([3.0], jnp.float32)                         # diffusion step

    params = init_params(kp)

    out = denoising_forward(x, edge_attr, q_Y_sample, adj, t, num_steps, params)
    out = jax.block_until_ready(out)

    ref = reference_forward(x, edge_attr, q_Y_sample, adj, t, num_steps, params)
    assert out.shape == (E, 1), out.shape
    # normalized max error (bf16 weight matmuls with f32 accumulation; the
    # gather/scatter message path is exact f32 now)
    err = float(jnp.max(jnp.abs(out - ref)) / (jnp.max(jnp.abs(ref)) + 1e-8))
    assert err < 5e-2, ("mismatch vs reference", err)

    print("KERNEL_OK")
</pallas_src>

<mosaic_0001>
module attributes {stable_mosaic.version = 11 : i64} {
  func.func @_denoise_kernel(%arg0: memref<8x1xf32, #tpu.memory_space<vmem>>, %arg1: memref<16x1xf32, #tpu.memory_space<vmem>>, %arg2: memref<16x1xf32, #tpu.memory_space<vmem>>, %arg3: memref<1x128xf32, #tpu.memory_space<vmem>>, %arg4: memref<24x128xf32, #tpu.memory_space<vmem>>, %arg5: memref<128x256xbf16, #tpu.memory_space<vmem>>, %arg6: memref<1x256xf32, #tpu.memory_space<vmem>>, %arg7: memref<1280x128xbf16, #tpu.memory_space<vmem>>, %arg8: memref<16xi32, #tpu.memory_space<smem>>, %arg9: memref<16xi32, #tpu.memory_space<smem>>, %arg10: memref<8xf32, #tpu.memory_space<smem>>, %arg11: memref<16x1xf32, #tpu.memory_space<vmem>>, %arg12: memref<8x128xf32, #tpu.memory_space<vmem>>, %arg13: memref<8x128xf32, #tpu.memory_space<vmem>>, %arg14: memref<16x128xf32, #tpu.memory_space<vmem>>, %arg15: memref<16x128xf32, #tpu.memory_space<vmem>>, %arg16: memref<16x128xf32, #tpu.memory_space<vmem>>) attributes {dimension_semantics = [], scalar_prefetch = 0 : i64, scratch_operands = 5 : i64, tpu.core_type = #tpu.core_type<tc>} {
    %c0 = arith.constant 0 : index
    %c0_0 = arith.constant 0 : index
    %0 = vector.load %arg0[%c0, %c0_0] : memref<8x1xf32, #tpu.memory_space<vmem>>, vector<8x1xf32>
    %c0_1 = arith.constant 0 : index
    %c0_2 = arith.constant 0 : index
    %1 = vector.load %arg1[%c0_1, %c0_2] : memref<16x1xf32, #tpu.memory_space<vmem>>, vector<16x1xf32>
    %c0_3 = arith.constant 0 : index
    %c0_4 = arith.constant 0 : index
    %2 = vector.load %arg2[%c0_3, %c0_4] : memref<16x1xf32, #tpu.memory_space<vmem>>, vector<16x1xf32>
    %c0_5 = arith.constant 0 : index
    %c0_6 = arith.constant 0 : index
    %3 = vector.load %arg4[%c0_5, %c0_6] : memref<24x128xf32, #tpu.memory_space<vmem>>, vector<1x128xf32>
    %4 = vector.broadcast %1 : vector<16x1xf32> to vector<16x128xf32>
    %5 = vector.broadcast %3 : vector<1x128xf32> to vector<16x128xf32>
    %6 = arith.mulf %4, %5 : vector<16x128xf32>
    %c1 = arith.constant 1 : index
    %c0_7 = arith.constant 0 : index
    %7 = vector.load %arg4[%c1, %c0_7] : memref<24x128xf32, #tpu.memory_space<vmem>>, vector<1x128xf32>
    %8 = vector.broadcast %2 : vector<16x1xf32> to vector<16x128xf32>
    %9 = vector.broadcast %7 : vector<1x128xf32> to vector<16x128xf32>
    %10 = arith.mulf %8, %9 : vector<16x128xf32>
    %11 = arith.addf %6, %10 : vector<16x128xf32>
    %c2 = arith.constant 2 : index
    %c0_8 = arith.constant 0 : index
    %12 = vector.load %arg4[%c2, %c0_8] : memref<24x128xf32, #tpu.memory_space<vmem>>, vector<1x128xf32>
    %13 = vector.broadcast %12 : vector<1x128xf32> to vector<16x128xf32>
    %14 = arith.addf %11, %13 : vector<16x128xf32>
    %c3 = arith.constant 3 : index
    %c0_9 = arith.constant 0 : index
    %15 = vector.load %arg4[%c3, %c0_9] : memref<24x128xf32, #tpu.memory_space<vmem>>, vector<1x128xf32>
    %16 = vector.broadcast %15 : vector<1x128xf32> to vector<16x128xf32>
    %17 = arith.mulf %14, %16 : vector<16x128xf32>
    %cst = arith.constant dense<0.000000e+00> : vector<16xf32>
    %18 = vector.multi_reduction <add>, %17, %cst [1] : vector<16x128xf32> to vector<16xf32>
    %19 = vector.shape_cast %18 : vector<16xf32> to vector<16x1xf32>
    %c0_10 = arith.constant 0 : index
    %20 = memref.load %arg10[%c0_10] : memref<8xf32, #tpu.memory_space<smem>>
    %21 = vector.broadcast %20 : f32 to vector<16x1xf32>
    %22 = arith.addf %19, %21 : vector<16x1xf32>
    %23 = arith.truncf %14 : vector<16x128xf32> to vector<16x128xbf16>
    %c0_11 = arith.constant 0 : index
    %c0_12 = arith.constant 0 : index
    %24 = vector.load %arg3[%c0_11, %c0_12] : memref<1x128xf32, #tpu.memory_space<vmem>>, vector<1x128xf32>
    %25 = arith.truncf %24 : vector<1x128xf32> to vector<1x128xbf16>
    %c0_13 = arith.constant 0 : index
    %c0_14 = arith.constant 0 : index
    %26 = vector.load %arg5[%c0_13, %c0_14] : memref<128x256xbf16, #tpu.memory_space<vmem>>, vector<128x256xbf16>
    %cst_15 = arith.constant dense<0.000000e+00> : vector<1x256xf32>
    %27 = tpu.matmul %25, %26, %cst_15 {dimension_numbers = #tpu.dot_dimension_numbers<[1], [0], [0], [1], [0, 0, 1, 1], [], []>} : vector<1x128xbf16>, vector<128x256xbf16>, vector<1x256xf32> -> vector<1x256xf32>
    %c0_16 = arith.constant 0 : index
    %c0_17 = arith.constant 0 : index
    %28 = vector.load %arg6[%c0_16, %c0_17] : memref<1x256xf32, #tpu.memory_space<vmem>>, vector<1x256xf32>
    %29 = arith.addf %27, %28 : vector<1x256xf32>
    %cst_18 = arith.constant 0.000000e+00 : f32
    %30 = vector.broadcast %cst_18 : f32 to vector<1x256xf32>
    %31 = arith.maximumf %29, %30 : vector<1x256xf32>
    %32 = arith.truncf %31 : vector<1x256xf32> to vector<1x256xbf16>
    %c0_19 = arith.constant 0 : index
    %c0_20 = arith.constant 0 : index
    %33 = vector.load %arg7[%c0_19, %c0_20] : memref<1280x128xbf16, #tpu.memory_space<vmem>>, vector<256x128xbf16>
    %cst_21 = arith.constant dense<0.000000e+00> : vector<1x128xf32>
    %34 = tpu.matmul %32, %33, %cst_21 {dimension_numbers = #tpu.dot_dimension_numbers<[1], [0], [0], [1], [0, 0, 1, 1], [], []>} : vector<1x256xbf16>, vector<256x128xbf16>, vector<1x128xf32> -> vector<1x128xf32>
    %c10 = arith.constant 10 : index
    %c0_22 = arith.constant 0 : index
    %35 = vector.load %arg4[%c10, %c0_22] : memref<24x128xf32, #tpu.memory_space<vmem>>, vector<1x128xf32>
    %36 = arith.addf %34, %35 : vector<1x128xf32>
    %37 = vector.shape_cast %0 : vector<8x1xf32> to vector<8x1xf32>
    %38 = vector.broadcast %37 : vector<8x1xf32> to vector<8x128xf32>
    %c0_23 = arith.constant 0 : index
    %c0_24 = arith.constant 0 : index
    %39 = vector.load %arg12[%c0_23, %c0_24] : memref<8x128xf32, #tpu.memory_space<vmem>>, vector<8x128xf32>
    tpu.vector_store %arg12[%c0_23, %c0_24], %38 {strides = array<i32>} : memref<8x128xf32, #tpu.memory_space<vmem>>, vector<8x128xf32>,
    %40 = vector.shape_cast %22 : vector<16x1xf32> to vector<16x1xf32>
    %41 = vector.broadcast %40 : vector<16x1xf32> to vector<16x128xf32>
    %c0_25 = arith.constant 0 : index
    %c0_26 = arith.constant 0 : index
    %42 = vector.load %arg14[%c0_25, %c0_26] : memref<16x128xf32, #tpu.memory_space<vmem>>, vector<16x128xf32>
    tpu.vector_store %arg14[%c0_25, %c0_26], %41 {strides = array<i32>} : memref<16x128xf32, #tpu.memory_space<vmem>>, vector<16x128xf32>,
    %cst_27 = arith.constant 0.000000e+00 : f32
    %43 = vector.broadcast %cst_27 : f32 to vector<8x128xf32>
    %c0_28 = arith.constant 0 : index
    %c0_29 = arith.constant 0 : index
    %44 = vector.load %arg13[%c0_28, %c0_29] : memref<8x128xf32, #tpu.memory_space<vmem>>, vector<8x128xf32>
    tpu.vector_store %arg13[%c0_28, %c0_29], %43 {strides = array<i32>} : memref<8x128xf32, #tpu.memory_space<vmem>>, vector<8x128xf32>,
    %c0_i32 = arith.constant 0 : i32
    %c16_i32 = arith.constant 16 : i32
    %45 = arith.addi %c0_i32, %c16_i32 : i32
    %c1_i32 = arith.constant 1 : i32
    scf.for %arg17 = %c0_i32 to %45 step %c1_i32  : i32 {
      %168 = arith.index_cast %arg17 : i32 to index
      %169 = memref.load %arg8[%168] : memref<16xi32, #tpu.memory_space<smem>>
      %170 = arith.index_cast %arg17 : i32 to index
      %171 = memref.load %arg9[%170] : memref<16xi32, #tpu.memory_space<smem>>
      %172 = arith.index_cast %169 : i32 to index
      %c0_114 = arith.constant 0 : index
      %173 = vector.load %arg12[%172, %c0_114] : memref<8x128xf32, #tpu.memory_space<vmem>>, vector<1x128xf32>
      %174 = arith.index_cast %arg17 : i32 to index
      %c0_115 = arith.constant 0 : index
      %175 = vector.load %arg14[%174, %c0_115] : memref<16x128xf32, #tpu.memory_space<vmem>>, vector<1x128xf32>
      %176 = arith.addf %173, %175 : vector<1x128xf32>
      %cst_116 = arith.constant 0.000000e+00 : f32
      %177 = vector.broadcast %cst_116 : f32 to vector<1x128xf32>
      %178 = arith.maximumf %176, %177 : vector<1x128xf32>
      %179 = arith.index_cast %171 : i32 to index
      %c0_117 = arith.constant 0 : index
      %180 = vector.load %arg13[%179, %c0_117] : memref<8x128xf32, #tpu.memory_space<vmem>>, vector<1x128xf32>
      %181 = arith.addf %180, %178 : vector<1x128xf32>
      %182 = arith.index_cast %171 : i32 to index
      %c0_118 = arith.constant 0 : index
      %183 = vector.load %arg13[%182, %c0_118] : memref<8x128xf32, #tpu.memory_space<vmem>>, vector<1x128xf32>
      tpu.vector_store %arg13[%182, %c0_118], %181 {strides = array<i32>} : memref<8x128xf32, #tpu.memory_space<vmem>>, vector<1x128xf32>,
    }
    %c16_i32_30 = arith.constant 16 : i32
    %c0_31 = arith.constant 0 : index
    %c0_32 = arith.constant 0 : index
    %46 = vector.load %arg13[%c0_31, %c0_32] : memref<8x128xf32, #tpu.memory_space<vmem>>, vector<8x128xf32>
    %c0_33 = arith.constant 0 : index
    %c0_34 = arith.constant 0 : index
    %47 = vector.load %arg12[%c0_33, %c0_34] : memref<8x128xf32, #tpu.memory_space<vmem>>, vector<8x128xf32>
    %48 = arith.addf %46, %47 : vector<8x128xf32>
    %c4 = arith.constant 4 : index
    %c0_35 = arith.constant 0 : index
    %49 = vector.load %arg4[%c4, %c0_35] : memref<24x128xf32, #tpu.memory_space<vmem>>, vector<1x128xf32>
    %50 = vector.broadcast %49 : vector<1x128xf32> to vector<8x128xf32>
    %51 = arith.mulf %48, %50 : vector<8x128xf32>
    %c5 = arith.constant 5 : index
    %c0_36 = arith.constant 0 : index
    %52 = vector.load %arg4[%c5, %c0_36] : memref<24x128xf32, #tpu.memory_space<vmem>>, vector<1x128xf32>
    %53 = vector.broadcast %52 : vector<1x128xf32> to vector<8x128xf32>
    %54 = arith.addf %51, %53 : vector<8x128xf32>
    %55 = vector.broadcast %36 : vector<1x128xf32> to vector<8x128xf32>
    %56 = arith.addf %54, %55 : vector<8x128xf32>
    %c0_37 = arith.constant 0 : index
    %c0_38 = arith.constant 0 : index
    %57 = vector.load %arg12[%c0_37, %c0_38] : memref<8x128xf32, #tpu.memory_space<vmem>>, vector<8x128xf32>
    tpu.vector_store %arg12[%c0_37, %c0_38], %56 {strides = array<i32>} : memref<8x128xf32, #tpu.memory_space<vmem>>, vector<8x128xf32>,
    %c6 = arith.constant 6 : index
    %c0_39 = arith.constant 0 : index
    %58 = vector.load %arg4[%c6, %c0_39] : memref<24x128xf32, #tpu.memory_space<vmem>>, vector<1x128xf32>
    %c7 = arith.constant 7 : index
    %c0_40 = arith.constant 0 : index
    %59 = vector.load %arg4[%c7, %c0_40] : memref<24x128xf32, #tpu.memory_space<vmem>>, vector<1x128xf32>
    %c256 = arith.constant 256 : index
    %c0_41 = arith.constant 0 : index
    %60 = vector.load %arg7[%c256, %c0_41] : memref<1280x128xbf16, #tpu.memory_space<vmem>>, vector<128x128xbf16>
    %cst_42 = arith.constant dense<0.000000e+00> : vector<16x128xf32>
    %61 = tpu.matmul %23, %60, %cst_42 {dimension_numbers = #tpu.dot_dimension_numbers<[1], [0], [0], [1], [0, 0, 1, 1], [], []>} : vector<16x128xbf16>, vector<128x128xbf16>, vector<16x128xf32> -> vector<16x128xf32>
    %62 = vector.broadcast %58 : vector<1x128xf32> to vector<16x128xf32>
    %63 = arith.addf %61, %62 : vector<16x128xf32>
    %c0_43 = arith.constant 0 : index
    %c0_44 = arith.constant 0 : index
    %64 = vector.load %arg14[%c0_43, %c0_44] : memref<16x128xf32, #tpu.memory_space<vmem>>, vector<16x128xf32>
    tpu.vector_store %arg14[%c0_43, %c0_44], %63 {strides = array<i32>} : memref<16x128xf32, #tpu.memory_space<vmem>>, vector<16x128xf32>,
    %cst_45 = arith.constant 0.000000e+00 : f32
    %65 = vector.broadcast %cst_45 : f32 to vector<8x128xf32>
    %c0_46 = arith.constant 0 : index
    %c0_47 = arith.constant 0 : index
    %66 = vector.load %arg13[%c0_46, %c0_47] : memref<8x128xf32, #tpu.memory_space<vmem>>, vector<8x128xf32>
    tpu.vector_store %arg13[%c0_46, %c0_47], %65 {strides = array<i32>} : memref<8x128xf32, #tpu.memory_space<vmem>>, vector<8x128xf32>,
    %c0_i32_48 = arith.constant 0 : i32
    %c16_i32_49 = arith.constant 16 : i32
    %67 = arith.addi %c0_i32_48, %c16_i32_49 : i32
    %c1_i32_50 = arith.constant 1 : i32
    scf.for %arg17 = %c0_i32_48 to %67 step %c1_i32_50  : i32 {
      %168 = arith.index_cast %arg17 : i32 to index
      %169 = memref.load %arg8[%168] : memref<16xi32, #tpu.memory_space<smem>>
      %170 = arith.index_cast %arg17 : i32 to index
      %171 = memref.load %arg9[%170] : memref<16xi32, #tpu.memory_space<smem>>
      %172 = arith.index_cast %169 : i32 to index
      %c0_114 = arith.constant 0 : index
      %173 = vector.load %arg12[%172, %c0_114] : memref<8x128xf32, #tpu.memory_space<vmem>>, vector<1x128xf32>
      %174 = arith.index_cast %arg17 : i32 to index
      %c0_115 = arith.constant 0 : index
      %175 = vector.load %arg14[%174, %c0_115] : memref<16x128xf32, #tpu.memory_space<vmem>>, vector<1x128xf32>
      %176 = arith.addf %173, %175 : vector<1x128xf32>
      %cst_116 = arith.constant 0.000000e+00 : f32
      %177 = vector.broadcast %cst_116 : f32 to vector<1x128xf32>
      %178 = arith.maximumf %176, %177 : vector<1x128xf32>
      %179 = arith.index_cast %171 : i32 to index
      %c0_117 = arith.constant 0 : index
      %180 = vector.load %arg13[%179, %c0_117] : memref<8x128xf32, #tpu.memory_space<vmem>>, vector<1x128xf32>
      %181 = arith.addf %180, %178 : vector<1x128xf32>
      %182 = arith.index_cast %171 : i32 to index
      %c0_118 = arith.constant 0 : index
      %183 = vector.load %arg13[%182, %c0_118] : memref<8x128xf32, #tpu.memory_space<vmem>>, vector<1x128xf32>
      tpu.vector_store %arg13[%182, %c0_118], %181 {strides = array<i32>} : memref<8x128xf32, #tpu.memory_space<vmem>>, vector<1x128xf32>,
    }
    %c16_i32_51 = arith.constant 16 : i32
    %c0_52 = arith.constant 0 : index
    %c0_53 = arith.constant 0 : index
    %68 = vector.load %arg12[%c0_52, %c0_53] : memref<8x128xf32, #tpu.memory_space<vmem>>, vector<8x128xf32>
    %c0_54 = arith.constant 0 : index
    %c0_55 = arith.constant 0 : index
    %69 = vector.load %arg13[%c0_54, %c0_55] : memref<8x128xf32, #tpu.memory_space<vmem>>, vector<8x128xf32>
    %70 = arith.addf %69, %68 : vector<8x128xf32>
    %71 = arith.truncf %70 : vector<8x128xf32> to vector<8x128xbf16>
    %c384 = arith.constant 384 : index
    %c0_56 = arith.constant 0 : index
    %72 = vector.load %arg7[%c384, %c0_56] : memref<1280x128xbf16, #tpu.memory_space<vmem>>, vector<128x128xbf16>
    %cst_57 = arith.constant dense<0.000000e+00> : vector<8x128xf32>
    %73 = tpu.matmul %71, %72, %cst_57 {dimension_numbers = #tpu.dot_dimension_numbers<[1], [0], [0], [1], [0, 0, 1, 1], [], []>} : vector<8x128xbf16>, vector<128x128xbf16>, vector<8x128xf32> -> vector<8x128xf32>
    %74 = vector.broadcast %59 : vector<1x128xf32> to vector<8x128xf32>
    %75 = arith.addf %73, %74 : vector<8x128xf32>
    %76 = vector.broadcast %36 : vector<1x128xf32> to vector<8x128xf32>
    %77 = arith.addf %75, %76 : vector<8x128xf32>
    %c0_58 = arith.constant 0 : index
    %c0_59 = arith.constant 0 : index
    %78 = vector.load %arg12[%c0_58, %c0_59] : memref<8x128xf32, #tpu.memory_space<vmem>>, vector<8x128xf32>
    tpu.vector_store %arg12[%c0_58, %c0_59], %77 {strides = array<i32>} : memref<8x128xf32, #tpu.memory_space<vmem>>, vector<8x128xf32>,
    %c8 = arith.constant 8 : index
    %c0_60 = arith.constant 0 : index
    %79 = vector.load %arg4[%c8, %c0_60] : memref<24x128xf32, #tpu.memory_space<vmem>>, vector<1x128xf32>
    %c9 = arith.constant 9 : index
    %c0_61 = arith.constant 0 : index
    %80 = vector.load %arg4[%c9, %c0_61] : memref<24x128xf32, #tpu.memory_space<vmem>>, vector<1x128xf32>
    %c512 = arith.constant 512 : index
    %c0_62 = arith.constant 0 : index
    %81 = vector.load %arg7[%c512, %c0_62] : memref<1280x128xbf16, #tpu.memory_space<vmem>>, vector<128x128xbf16>
    %cst_63 = arith.constant dense<0.000000e+00> : vector<16x128xf32>
    %82 = tpu.matmul %23, %81, %cst_63 {dimension_numbers = #tpu.dot_dimension_numbers<[1], [0], [0], [1], [0, 0, 1, 1], [], []>} : vector<16x128xbf16>, vector<128x128xbf16>, vector<16x128xf32> -> vector<16x128xf32>
    %83 = vector.broadcast %79 : vector<1x128xf32> to vector<16x128xf32>
    %84 = arith.addf %82, %83 : vector<16x128xf32>
    %c0_64 = arith.constant 0 : index
    %c0_65 = arith.constant 0 : index
    %85 = vector.load %arg14[%c0_64, %c0_65] : memref<16x128xf32, #tpu.memory_space<vmem>>, vector<16x128xf32>
    tpu.vector_store %arg14[%c0_64, %c0_65], %84 {strides = array<i32>} : memref<16x128xf32, #tpu.memory_space<vmem>>, vector<16x128xf32>,
    %cst_66 = arith.constant 0.000000e+00 : f32
    %86 = vector.broadcast %cst_66 : f32 to vector<8x128xf32>
    %c0_67 = arith.constant 0 : index
    %c0_68 = arith.constant 0 : index
    %87 = vector.load %arg13[%c0_67, %c0_68] : memref<8x128xf32, #tpu.memory_space<vmem>>, vector<8x128xf32>
    tpu.vector_store %arg13[%c0_67, %c0_68], %86 {strides = array<i32>} : memref<8x128xf32, #tpu.memory_space<vmem>>, vector<8x128xf32>,
    %c0_i32_69 = arith.constant 0 : i32
    %c16_i32_70 = arith.constant 16 : i32
    %88 = arith.addi %c0_i32_69, %c16_i32_70 : i32
    %c1_i32_71 = arith.constant 1 : i32
    scf.for %arg17 = %c0_i32_69 to %88 step %c1_i32_71  : i32 {
      %168 = arith.index_cast %arg17 : i32 to index
      %169 = memref.load %arg8[%168] : memref<16xi32, #tpu.memory_space<smem>>
      %170 = arith.index_cast %arg17 : i32 to index
      %171 = memref.load %arg9[%170] : memref<16xi32, #tpu.memory_space<smem>>
      %172 = arith.index_cast %169 : i32 to index
      %c0_114 = arith.constant 0 : index
      %173 = vector.load %arg12[%172, %c0_114] : memref<8x128xf32, #tpu.memory_space<vmem>>, vector<1x128xf32>
      %174 = arith.index_cast %arg17 : i32 to index
      %c0_115 = arith.constant 0 : index
      %175 = vector.load %arg14[%174, %c0_115] : memref<16x128xf32, #tpu.memory_space<vmem>>, vector<1x128xf32>
      %176 = arith.addf %173, %175 : vector<1x128xf32>
      %cst_116 = arith.constant 0.000000e+00 : f32
      %177 = vector.broadcast %cst_116 : f32 to vector<1x128xf32>
      %178 = arith.maximumf %176, %177 : vector<1x128xf32>
      %179 = arith.index_cast %171 : i32 to index
      %c0_117 = arith.constant 0 : index
      %180 = vector.load %arg13[%179, %c0_117] : memref<8x128xf32, #tpu.memory_space<vmem>>, vector<1x128xf32>
      %181 = arith.addf %180, %178 : vector<1x128xf32>
      %182 = arith.index_cast %171 : i32 to index
      %c0_118 = arith.constant 0 : index
      %183 = vector.load %arg13[%182, %c0_118] : memref<8x128xf32, #tpu.memory_space<vmem>>, vector<1x128xf32>
      tpu.vector_store %arg13[%182, %c0_118], %181 {strides = array<i32>} : memref<8x128xf32, #tpu.memory_space<vmem>>, vector<1x128xf32>,
    }
    %c16_i32_72 = arith.constant 16 : i32
    %c0_73 = arith.constant 0 : index
    %c0_74 = arith.constant 0 : index
    %89 = vector.load %arg12[%c0_73, %c0_74] : memref<8x128xf32, #tpu.memory_space<vmem>>, vector<8x128xf32>
    %c0_75 = arith.constant 0 : index
    %c0_76 = arith.constant 0 : index
    %90 = vector.load %arg13[%c0_75, %c0_76] : memref<8x128xf32, #tpu.memory_space<vmem>>, vector<8x128xf32>
    %91 = arith.addf %90, %89 : vector<8x128xf32>
    %92 = arith.truncf %91 : vector<8x128xf32> to vector<8x128xbf16>
    %c640 = arith.constant 640 : index
    %c0_77 = arith.constant 0 : index
    %93 = vector.load %arg7[%c640, %c0_77] : memref<1280x128xbf16, #tpu.memory_space<vmem>>, vector<128x128xbf16>
    %cst_78 = arith.constant dense<0.000000e+00> : vector<8x128xf32>
    %94 = tpu.matmul %92, %93, %cst_78 {dimension_numbers = #tpu.dot_dimension_numbers<[1], [0], [0], [1], [0, 0, 1, 1], [], []>} : vector<8x128xbf16>, vector<128x128xbf16>, vector<8x128xf32> -> vector<8x128xf32>
    %95 = vector.broadcast %80 : vector<1x128xf32> to vector<8x128xf32>
    %96 = arith.addf %94, %95 : vector<8x128xf32>
    %97 = vector.broadcast %36 : vector<1x128xf32> to vector<8x128xf32>
    %98 = arith.addf %96, %97 : vector<8x128xf32>
    %c0_79 = arith.constant 0 : index
    %c0_80 = arith.constant 0 : index
    %99 = vector.load %arg12[%c0_79, %c0_80] : memref<8x128xf32, #tpu.memory_space<vmem>>, vector<8x128xf32>
    tpu.vector_store %arg12[%c0_79, %c0_80], %98 {strides = array<i32>} : memref<8x128xf32, #tpu.memory_space<vmem>>, vector<8x128xf32>,
    %c0_i32_81 = arith.constant 0 : i32
    %c16_i32_82 = arith.constant 16 : i32
    %100 = arith.addi %c0_i32_81, %c16_i32_82 : i32
    %c1_i32_83 = arith.constant 1 : i32
    scf.for %arg17 = %c0_i32_81 to %100 step %c1_i32_83  : i32 {
      %168 = arith.index_cast %arg17 : i32 to index
      %169 = memref.load %arg8[%168] : memref<16xi32, #tpu.memory_space<smem>>
      %170 = arith.index_cast %169 : i32 to index
      %c0_114 = arith.constant 0 : index
      %171 = vector.load %arg12[%170, %c0_114] : memref<8x128xf32, #tpu.memory_space<vmem>>, vector<1x128xf32>
      %172 = arith.index_cast %arg17 : i32 to index
      %c0_115 = arith.constant 0 : index
      %173 = vector.load %arg15[%172, %c0_115] : memref<16x128xf32, #tpu.memory_space<vmem>>, vector<1x128xf32>
      tpu.vector_store %arg15[%172, %c0_115], %171 {strides = array<i32>} : memref<16x128xf32, #tpu.memory_space<vmem>>, vector<1x128xf32>,
      %174 = arith.index_cast %arg17 : i32 to index
      %175 = memref.load %arg9[%174] : memref<16xi32, #tpu.memory_space<smem>>
      %176 = arith.index_cast %175 : i32 to index
      %c0_116 = arith.constant 0 : index
      %177 = vector.load %arg12[%176, %c0_116] : memref<8x128xf32, #tpu.memory_space<vmem>>, vector<1x128xf32>
      %178 = arith.index_cast %arg17 : i32 to index
      %c0_117 = arith.constant 0 : index
      %179 = vector.load %arg16[%178, %c0_117] : memref<16x128xf32, #tpu.memory_space<vmem>>, vector<1x128xf32>
      tpu.vector_store %arg16[%178, %c0_117], %177 {strides = array<i32>} : memref<16x128xf32, #tpu.memory_space<vmem>>, vector<1x128xf32>,
    }
    %c16_i32_84 = arith.constant 16 : i32
    %c0_85 = arith.constant 0 : index
    %c0_86 = arith.constant 0 : index
    %101 = vector.load %arg15[%c0_85, %c0_86] : memref<16x128xf32, #tpu.memory_space<vmem>>, vector<16x128xf32>
    %c0_87 = arith.constant 0 : index
    %c0_88 = arith.constant 0 : index
    %102 = vector.load %arg16[%c0_87, %c0_88] : memref<16x128xf32, #tpu.memory_space<vmem>>, vector<16x128xf32>
    %103 = tpu.concatenate %101, %102 in 1 : vector<16x128xf32>, vector<16x128xf32> -> vector<16x256xf32>
    %104 = arith.truncf %103 : vector<16x256xf32> to vector<16x256xbf16>
    %c768 = arith.constant 768 : index
    %c0_89 = arith.constant 0 : index
    %105 = vector.load %arg7[%c768, %c0_89] : memref<1280x128xbf16, #tpu.memory_space<vmem>>, vector<256x128xbf16>
    %cst_90 = arith.constant dense<0.000000e+00> : vector<16x128xf32>
    %106 = tpu.matmul %104, %105, %cst_90 {dimension_numbers = #tpu.dot_dimension_numbers<[1], [0], [0], [1], [0, 0, 1, 1], [], []>} : vector<16x256xbf16>, vector<256x128xbf16>, vector<16x128xf32> -> vector<16x128xf32>
    %c13 = arith.constant 13 : index
    %c0_91 = arith.constant 0 : index
    %107 = vector.load %arg4[%c13, %c0_91] : memref<24x128xf32, #tpu.memory_space<vmem>>, vector<1x128xf32>
    %108 = vector.broadcast %2 : vector<16x1xf32> to vector<16x128xf32>
    %109 = vector.broadcast %107 : vector<1x128xf32> to vector<16x128xf32>
    %110 = arith.mulf %108, %109 : vector<16x128xf32>
    %111 = arith.addf %106, %110 : vector<16x128xf32>
    %c11 = arith.constant 11 : index
    %c0_92 = arith.constant 0 : index
    %112 = vector.load %arg4[%c11, %c0_92] : memref<24x128xf32, #tpu.memory_space<vmem>>, vector<1x128xf32>
    %113 = vector.broadcast %112 : vector<1x128xf32> to vector<16x128xf32>
    %114 = arith.addf %111, %113 : vector<16x128xf32>
    %c1024 = arith.constant 1024 : index
    %c0_93 = arith.constant 0 : index
    %115 = vector.load %arg7[%c1024, %c0_93] : memref<1280x128xbf16, #tpu.memory_space<vmem>>, vector<256x128xbf16>
    %cst_94 = arith.constant dense<0.000000e+00> : vector<16x128xf32>
    %116 = tpu.matmul %104, %115, %cst_94 {dimension_numbers = #tpu.dot_dimension_numbers<[1], [0], [0], [1], [0, 0, 1, 1], [], []>} : vector<16x256xbf16>, vector<256x128xbf16>, vector<16x128xf32> -> vector<16x128xf32>
    %c14 = arith.constant 14 : index
    %c0_95 = arith.constant 0 : index
    %117 = vector.load %arg4[%c14, %c0_95] : memref<24x128xf32, #tpu.memory_space<vmem>>, vector<1x128xf32>
    %118 = vector.broadcast %2 : vector<16x1xf32> to vector<16x128xf32>
    %119 = vector.broadcast %117 : vector<1x128xf32> to vector<16x128xf32>
    %120 = arith.mulf %118, %119 : vector<16x128xf32>
    %121 = arith.addf %116, %120 : vector<16x128xf32>
    %c12 = arith.constant 12 : index
    %c0_96 = arith.constant 0 : index
    %122 = vector.load %arg4[%c12, %c0_96] : memref<24x128xf32, #tpu.memory_space<vmem>>, vector<1x128xf32>
    %123 = vector.broadcast %122 : vector<1x128xf32> to vector<16x128xf32>
    %124 = arith.addf %121, %123 : vector<16x128xf32>
    %c15 = arith.constant 15 : index
    %c0_97 = arith.constant 0 : index
    %125 = vector.load %arg4[%c15, %c0_97] : memref<24x128xf32, #tpu.memory_space<vmem>>, vector<1x128xf32>
    %126 = vector.broadcast %125 : vector<1x128xf32> to vector<16x128xf32>
    %127 = arith.mulf %101, %126 : vector<16x128xf32>
    %cst_98 = arith.constant dense<0.000000e+00> : vector<16xf32>
    %128 = vector.multi_reduction <add>, %127, %cst_98 [1] : vector<16x128xf32> to vector<16xf32>
    %129 = vector.shape_cast %128 : vector<16xf32> to vector<16x1xf32>
    %c16 = arith.constant 16 : index
    %c0_99 = arith.constant 0 : index
    %130 = vector.load %arg4[%c16, %c0_99] : memref<24x128xf32, #tpu.memory_space<vmem>>, vector<1x128xf32>
    %131 = vector.broadcast %130 : vector<1x128xf32> to vector<16x128xf32>
    %132 = arith.mulf %102, %131 : vector<16x128xf32>
    %cst_100 = arith.constant dense<0.000000e+00> : vector<16xf32>
    %133 = vector.multi_reduction <add>, %132, %cst_100 [1] : vector<16x128xf32> to vector<16xf32>
    %134 = vector.shape_cast %133 : vector<16xf32> to vector<16x1xf32>
    %135 = arith.addf %129, %134 : vector<16x1xf32>
    %c1_101 = arith.constant 1 : index
    %136 = memref.load %arg10[%c1_101] : memref<8xf32, #tpu.memory_space<smem>>
    %137 = vector.broadcast %136 : f32 to vector<16x1xf32>
    %138 = arith.mulf %2, %137 : vector<16x1xf32>
    %139 = arith.addf %135, %138 : vector<16x1xf32>
    %c2_102 = arith.constant 2 : index
    %140 = memref.load %arg10[%c2_102] : memref<8xf32, #tpu.memory_space<smem>>
    %141 = vector.broadcast %140 : f32 to vector<16x1xf32>
    %142 = arith.addf %139, %141 : vector<16x1xf32>
    %cst_103 = arith.constant 0.000000e+00 : f32
    %143 = vector.broadcast %cst_103 : f32 to vector<16x128xf32>
    %144 = arith.maximumf %114, %143 : vector<16x128xf32>
    %cst_104 = arith.constant 0.000000e+00 : f32
    %145 = vector.broadcast %cst_104 : f32 to vector<16x128xf32>
    %146 = arith.maximumf %124, %145 : vector<16x128xf32>
    %cst_105 = arith.constant 0.000000e+00 : f32
    %147 = vector.broadcast %cst_105 : f32 to vector<16x1xf32>
    %148 = arith.maximumf %142, %147 : vector<16x1xf32>
    %c17 = arith.constant 17 : index
    %c0_106 = arith.constant 0 : index
    %149 = vector.load %arg4[%c17, %c0_106] : memref<24x128xf32, #tpu.memory_space<vmem>>, vector<1x128xf32>
    %150 = vector.broadcast %149 : vector<1x128xf32> to vector<16x128xf32>
    %151 = arith.mulf %144, %150 : vector<16x128xf32>
    %cst_107 = arith.constant dense<0.000000e+00> : vector<16xf32>
    %152 = vector.multi_reduction <add>, %151, %cst_107 [1] : vector<16x128xf32> to vector<16xf32>
    %153 = vector.shape_cast %152 : vector<16xf32> to vector<16x1xf32>
    %c18 = arith.constant 18 : index
    %c0_108 = arith.constant 0 : index
    %154 = vector.load %arg4[%c18, %c0_108] : memref<24x128xf32, #tpu.memory_space<vmem>>, vector<1x128xf32>
    %155 = vector.broadcast %154 : vector<1x128xf32> to vector<16x128xf32>
    %156 = arith.mulf %146, %155 : vector<16x128xf32>
    %cst_109 = arith.constant dense<0.000000e+00> : vector<16xf32>
    %157 = vector.multi_reduction <add>, %156, %cst_109 [1] : vector<16x128xf32> to vector<16xf32>
    %158 = vector.shape_cast %157 : vector<16xf32> to vector<16x1xf32>
    %159 = arith.addf %153, %158 : vector<16x1xf32>
    %c3_110 = arith.constant 3 : index
    %160 = memref.load %arg10[%c3_110] : memref<8xf32, #tpu.memory_space<smem>>
    %161 = vector.broadcast %160 : f32 to vector<16x1xf32>
    %162 = arith.mulf %148, %161 : vector<16x1xf32>
    %163 = arith.addf %159, %162 : vector<16x1xf32>
    %c4_111 = arith.constant 4 : index
    %164 = memref.load %arg10[%c4_111] : memref<8xf32, #tpu.memory_space<smem>>
    %165 = vector.broadcast %164 : f32 to vector<16x1xf32>
    %166 = arith.addf %163, %165 : vector<16x1xf32>
    %c0_112 = arith.constant 0 : index
    %c0_113 = arith.constant 0 : index
    %167 = vector.load %arg11[%c0_112, %c0_113] : memref<16x1xf32, #tpu.memory_space<vmem>>, vector<16x1xf32>
    tpu.vector_store %arg11[%c0_112, %c0_113], %166 {strides = array<i32>} : memref<16x1xf32, #tpu.memory_space<vmem>>, vector<16x1xf32>,
    return
  }
}

</mosaic_0001>

<llo_original>
// kernel: tpu_custom_call.1
$region0: #{tpu_custom_call.1}
  #allocation0 [shape = 'u32[]', space=smem, size = 0x4, offset = 0x4, fixed_abs, tag = 'smem constant byte address 0x4 - core index']
  #allocation1 [shape = 'u32[144,128]{1,0:T(1,128)}', space=vmem, size = 0x12000, scoped, tag = 'internal scratch']
  #allocation2 [shape = 'f32[8,128]{1,0:T(8,128)}', space=vmem, size = 0x1000, scoped, tag = 'scratch operand']
  #allocation3 [shape = 'f32[8,128]{1,0:T(8,128)}', space=vmem, size = 0x1000, scoped, tag = 'scratch operand']
  #allocation4 [shape = 'f32[16,128]{1,0:T(8,128)}', space=vmem, size = 0x2000, scoped, tag = 'scratch operand']
  #allocation5 [shape = 'f32[16,128]{1,0:T(8,128)}', space=vmem, size = 0x2000, scoped, tag = 'scratch operand']
  #allocation6 [shape = 'f32[16,128]{1,0:T(8,128)}', space=vmem, size = 0x2000, scoped, tag = 'scratch operand']
  %s0 = inlined_call_operand.vmem [shape: f32[8,1], index: 0, kind: input, shape index: {}]
  %s1 = inlined_call_operand.vmem [shape: f32[16,1], index: 1, kind: input, shape index: {}]
  %s2 = inlined_call_operand.vmem [shape: f32[16,1], index: 2, kind: input, shape index: {}]
  %s3 = inlined_call_operand.vmem [shape: f32[1,128], index: 3, kind: input, shape index: {}]
  %s4 = inlined_call_operand.vmem [shape: f32[24,128], index: 4, kind: input, shape index: {}]
  %s5 = inlined_call_operand.hbm [shape: bf16[128,256], index: 5, kind: input, shape index: {}]
  %s6 = inlined_call_operand.vmem [shape: f32[1,256], index: 6, kind: input, shape index: {}]
  %s7 = inlined_call_operand.hbm [shape: bf16[1280,128], index: 7, kind: input, shape index: {}]
  %s8 = inlined_call_operand.vmem [shape: s32[16], index: 8, kind: input, shape index: {}]
  %s9 = inlined_call_operand.vmem [shape: s32[16], index: 9, kind: input, shape index: {}]
  %s10 = inlined_call_operand.vmem [shape: f32[8], index: 10, kind: input, shape index: {}]
  %s11 = inlined_call_operand.vmem [shape: f32[16,1], index: 11, kind: output, shape index: {}]
  %s12 = sld [smem:[#allocation0]]
  $region102: #{tpu_custom_call.1} parent=0
    _
  %s14 = ssub.s32 1, %s12
  %s15 = scalar_select 0, %s14, %s12
  $region1: #{tpu_custom_call.1} parent=0
    #allocation7 [shape = 'u8[65536]{0}', space=vmem, size = 0x10000, scoped, tag = 'input window, operand 5, single buffered']
    #allocation8 [shape = 's32[1]{0}', space=sflag, size = 0x4, scoped, tag = 'scoped memory for tpu_custom_call.1']
    #allocation9 [shape = 's32[1]{0}', space=sflag, size = 0x4, scoped, tag = 'scoped memory for tpu_custom_call.1']
    #allocation10 [shape = 'u8[327680]{0}', space=vmem, size = 0x50000, scoped, tag = 'input window, operand 7, single buffered']
    #allocation11 [shape = 's32[1]{0}', space=sflag, size = 0x4, scoped, tag = 'scoped memory for tpu_custom_call.1']
    #allocation12 [shape = 'u8[512]{0}', space=smem, size = 0x200, scoped, tag = 'input window, operand 8, single buffered']
    #allocation13 [shape = 'u8[512]{0}', space=smem, size = 0x200, scoped, tag = 'input window, operand 9, single buffered']
    #allocation14 [shape = 's32[1]{0}', space=sflag, size = 0x4, scoped, tag = 'scoped memory for tpu_custom_call.1']
    #allocation15 [shape = 'u8[512]{0}', space=smem, size = 0x200, scoped, tag = 'input window, operand 10, single buffered']
    %16 = vsyncpa [#allocation8], 0
    %17 = vsyncpa [#allocation11], 0
    %18 = vsyncpa [#allocation9], 0
    %19 = vsyncpa [#allocation14], 0
    // Predicated region
    $region2: #{tpu_custom_call.1} parent=1 // pred_check
      _
    $region3: #{tpu_custom_call.1} parent=1 // pred_check_branch
      %21 = sbr.rel (0) target = $region5
    $region4: #{tpu_custom_call.1} parent=1 // pred_region
      _
    $region5: #{tpu_custom_call.1} parent=1 // pred_fallthru
      _
    // Predicated region
    $region6: #{tpu_custom_call.1} parent=1 // pred_check
      _
    $region7: #{tpu_custom_call.1} parent=1 // pred_check_branch
      %23 = sbr.rel (0) target = $region9
    $region8: #{tpu_custom_call.1} parent=1 // pred_region
      _
    $region9: #{tpu_custom_call.1} parent=1 // pred_fallthru
      _
    // Predicated region
    $region10: #{tpu_custom_call.1} parent=1 // pred_check
      _
    $region11: #{tpu_custom_call.1} parent=1 // pred_check_branch
      %25 = sbr.rel (0) target = $region13
    $region12: #{tpu_custom_call.1} parent=1 // pred_region
      _
    $region13: #{tpu_custom_call.1} parent=1 // pred_fallthru
      _
    // Predicated region
    $region14: #{tpu_custom_call.1} parent=1 // pred_check
      _
    $region15: #{tpu_custom_call.1} parent=1 // pred_check_branch
      %27 = sbr.rel (0) target = $region17
    $region16: #{tpu_custom_call.1} parent=1 // pred_region
      _
    $region17: #{tpu_custom_call.1} parent=1 // pred_fallthru
      _
    // Predicated region
    $region18: #{tpu_custom_call.1} parent=1 // pred_check
      _
    $region19: #{tpu_custom_call.1} parent=1 // pred_check_branch
      %29 = sbr.rel (0) target = $region21
    $region20: #{tpu_custom_call.1} parent=1 // pred_region
      _
    $region21: #{tpu_custom_call.1} parent=1 // pred_fallthru
      _
    // Predicated region
    $region22: #{tpu_custom_call.1} parent=1 // pred_check
      _
    $region23: #{tpu_custom_call.1} parent=1 // pred_check_branch
      %31 = sbr.rel (0) target = $region25
    $region24: #{tpu_custom_call.1} parent=1 // pred_region
      %s33 = ssub.s32 2048, 2048
      %34 = vsyncadd [#allocation8], %s33
      %s35 = sshll.u32 [#allocation7], 4
      %s36 = int_to_ptr.vmem [resolvable:$true] %s35
      %41 = dma.hbm_to_vmem [thread:$0]  %s5, 2048, %s36, [#allocation8], 128, 128, 8
    $region25: #{tpu_custom_call.1} parent=1 // pred_fallthru
      _
    // Predicated region
    $region26: #{tpu_custom_call.1} parent=1 // pred_check
      _
    $region27: #{tpu_custom_call.1} parent=1 // pred_check_branch
      %43 = sbr.rel (0) target = $region29
    $region28: #{tpu_custom_call.1} parent=1 // pred_region
      _
    $region29: #{tpu_custom_call.1} parent=1 // pred_fallthru
      _
    // Predicated region
    $region30: #{tpu_custom_call.1} parent=1 // pred_check
      _
    $region31: #{tpu_custom_call.1} parent=1 // pred_check_branch
      %45 = sbr.rel (0) target = $region33
    $region32: #{tpu_custom_call.1} parent=1 // pred_region
      %s47 = ssub.s32 10240, 10240
      %48 = vsyncadd [#allocation11], %s47
      %s49 = sshll.u32 [#allocation10], 4
      %s50 = int_to_ptr.vmem [resolvable:$true] %s49
      %55 = dma.hbm_to_vmem [thread:$0]  %s7, 10240, %s50, [#allocation11], 64, 64, 4
    $region33: #{tpu_custom_call.1} parent=1 // pred_fallthru
      _
    // Predicated region
    $region34: #{tpu_custom_call.1} parent=1 // pred_check
      _
    $region35: #{tpu_custom_call.1} parent=1 // pred_check_branch
      %57 = sbr.rel (0) target = $region37
    $region36: #{tpu_custom_call.1} parent=1 // pred_region
      %s59 = ssub.s32 16, 16
      %60 = vsyncadd [#allocation9], %s59
      %s62 = sshll.u32 %s8, 4
      %s63 = int_to_ptr.vmem [resolvable:$true] %s62
      %65 = dma.vmem_to_smem %s63, 16, [#allocation12], [#allocation9]
    $region37: #{tpu_custom_call.1} parent=1 // pred_fallthru
      _
    // Predicated region
    $region38: #{tpu_custom_call.1} parent=1 // pred_check
      _
    $region39: #{tpu_custom_call.1} parent=1 // pred_check_branch
      %67 = sbr.rel (0) target = $region41
    $region40: #{tpu_custom_call.1} parent=1 // pred_region
      %s69 = ssub.s32 16, 16
      %70 = vsyncadd [#allocation14], %s69
      %s72 = sshll.u32 %s9, 4
      %s73 = int_to_ptr.vmem [resolvable:$true] %s72
      %75 = dma.vmem_to_smem %s73, 16, [#allocation13], [#allocation14]
    $region41: #{tpu_custom_call.1} parent=1 // pred_fallthru
      _
    // Predicated region
    $region42: #{tpu_custom_call.1} parent=1 // pred_check
      _
    $region43: #{tpu_custom_call.1} parent=1 // pred_check_branch
      %77 = sbr.rel (0) target = $region45
    $region44: #{tpu_custom_call.1} parent=1 // pred_region
      %s79 = ssub.s32 16, 16
      %80 = vsyncadd [#allocation14], %s79
      %s82 = sshll.u32 %s10, 4
      %s83 = int_to_ptr.vmem [resolvable:$true] %s82
      %85 = dma.vmem_to_smem %s83, 16, [#allocation15], [#allocation14]
    $region45: #{tpu_custom_call.1} parent=1 // pred_fallthru
      _
    // Predicated region
    $region46: #{tpu_custom_call.1} parent=1 // pred_check
      _
    $region47: #{tpu_custom_call.1} parent=1 // pred_check_branch
      %87 = sbr.rel (0) target = $region49
    $region48: #{tpu_custom_call.1} parent=1 // pred_region
      %88 = dma.done [#allocation8], 2048
    $region49: #{tpu_custom_call.1} parent=1 // pred_fallthru
      _
    // Predicated region
    $region50: #{tpu_custom_call.1} parent=1 // pred_check
      _
    $region51: #{tpu_custom_call.1} parent=1 // pred_check_branch
      %90 = sbr.rel (0) target = $region53
    $region52: #{tpu_custom_call.1} parent=1 // pred_region
      %91 = dma.done [#allocation11], 10240
    $region53: #{tpu_custom_call.1} parent=1 // pred_fallthru
      _
    // Predicated region
    $region54: #{tpu_custom_call.1} parent=1 // pred_check
      _
    $region55: #{tpu_custom_call.1} parent=1 // pred_check_branch
      %93 = sbr.rel (0) target = $region57
    $region56: #{tpu_custom_call.1} parent=1 // pred_region
      %94 = dma.done [#allocation9], 16
    $region57: #{tpu_custom_call.1} parent=1 // pred_fallthru
      _
    // Predicated region
    $region58: #{tpu_custom_call.1} parent=1 // pred_check
      _
    $region59: #{tpu_custom_call.1} parent=1 // pred_check_branch
      %96 = sbr.rel (0) target = $region61
    $region60: #{tpu_custom_call.1} parent=1 // pred_region
      %97 = dma.done [#allocation14], 16
    $region61: #{tpu_custom_call.1} parent=1 // pred_fallthru
      _
    // Predicated region
    $region62: #{tpu_custom_call.1} parent=1 // pred_check
      _
    $region63: #{tpu_custom_call.1} parent=1 // pred_check_branch
      %99 = sbr.rel (0) target = $region65
    $region64: #{tpu_custom_call.1} parent=1 // pred_region
      %100 = dma.done [#allocation14], 16
    $region65: #{tpu_custom_call.1} parent=1 // pred_fallthru
      _
    %101 = sfence
    %v103 = vld [vmem:[%s0] sm:$0xff]
    %v104 = vld [vmem:[%s1] sm:$0xff]
    %v105 = vld [vmem:[%s1 + $0x8] sm:$0xff]
    %v106 = vld [vmem:[%s2] sm:$0xff]
    %v107 = vld [vmem:[%s2 + $0x8] sm:$0xff]
    %v108 = vld [vmem:[%s4] sm:$0x1]
    %110 = vset.pattern.permute.xlu0 0
    %111 = vperm.xlu0 %110, %v104
    %v112 = vpop.permute.xlu0 %111
    %115 = vset.pattern.permute.xlu0 0
    %116 = vperm.xlu0 %115, %v105
    %v117 = vpop.permute.xlu0 %116
    %v119 = vlaneseq
    %v120 = vshrl.u32 %v119, 7
    %v121 = vsub.s32 0, %v120
    %v122 = vrot.slane %v108, %v121
    %v123 = vmul.f32 %v112, %v122
    %v124 = vmul.f32 %v117, %v122
    %v125 = vld [vmem:[%s4 + $0x1] sm:$0x1]
    %127 = vset.pattern.permute.xlu0 0
    %128 = vperm.xlu0 %127, %v106
    %v129 = vpop.permute.xlu0 %128
    %132 = vset.pattern.permute.xlu0 0
    %133 = vperm.xlu0 %132, %v107
    %v134 = vpop.permute.xlu0 %133
    %v136 = vlaneseq
    %v137 = vshrl.u32 %v136, 7
    %v138 = vsub.s32 0, %v137
    %v139 = vrot.slane %v125, %v138
    %v140 = vmul.f32 %v129, %v139
    %v141 = vmul.f32 %v134, %v139
    %v142 = vadd.f32 %v123, %v140
    %v143 = vadd.f32 %v124, %v141
    %v144 = vld [vmem:[%s4 + $0x2] sm:$0x1]
    %v145 = vlaneseq
    %v146 = vshrl.u32 %v145, 7
    %v147 = vsub.s32 0, %v146
    %v148 = vrot.slane %v144, %v147
    %v149 = vadd.f32 %v142, %v148
    %v150 = vadd.f32 %v143, %v148
    %v151 = vld [vmem:[%s4 + $0x3] sm:$0x1]
    %v152 = vlaneseq
    %v153 = vshrl.u32 %v152, 7
    %v154 = vsub.s32 0, %v153
    %v155 = vrot.slane %v151, %v154
    %v156 = vmul.f32 %v149, %v155
    %v157 = vmul.f32 %v150, %v155
    %158 = vadd.xlane.f32.xlu0 %v156
    %v159 = vpop.xlane.xlu0 %158
    %160 = vadd.xlane.f32.xlu0 %v157
    %v161 = vpop.xlane.xlu0 %160
    %s162 = sld [smem:[#allocation15]]
    %v163 = vstv %s162
    %v164 = vadd.f32 %v159, %v163
    %v165 = vadd.f32 %v161, %v163
    %v166 = vpack.c.bf16 %v150, %v149
    %v167 = vld [vmem:[%s3] sm:$0x1]
    %v168 = vpack.c.bf16 %v167, %v167
    %v169 = vld [vmem:[#allocation7] sm:$0xff]
    %v170 = vld [vmem:[#allocation7 + $0x8] sm:$0xff]
    %v171 = vld [vmem:[#allocation7 + $0x10] sm:$0xff]
    %v172 = vld [vmem:[#allocation7 + $0x18] sm:$0xff]
    %v173 = vld [vmem:[#allocation7 + $0x20] sm:$0xff]
    %v174 = vld [vmem:[#allocation7 + $0x28] sm:$0xff]
    %v175 = vld [vmem:[#allocation7 + $0x30] sm:$0xff]
    %v176 = vld [vmem:[#allocation7 + $0x38] sm:$0xff]
    %v177 = vld [vmem:[#allocation7 + $0x40] sm:$0xff]
    %v178 = vld [vmem:[#allocation7 + $0x48] sm:$0xff]
    %v179 = vld [vmem:[#allocation7 + $0x50] sm:$0xff]
    %v180 = vld [vmem:[#allocation7 + $0x58] sm:$0xff]
    %v181 = vld [vmem:[#allocation7 + $0x60] sm:$0xff]
    %v182 = vld [vmem:[#allocation7 + $0x68] sm:$0xff]
    %v183 = vld [vmem:[#allocation7 + $0x70] sm:$0xff]
    %v184 = vld [vmem:[#allocation7 + $0x78] sm:$0xff]
    %v185 = vld [vmem:[%s6] sm:$0x3]
    %v202 = vunpack.c.l.b16 %v169
    %v203 = vunpack.c.h.b16 %v169
    %v204 = vunpack.c.l.b16 %v170
    %v205 = vunpack.c.h.b16 %v170
    %v206 = vunpack.c.l.b16 %v171
    %v207 = vunpack.c.h.b16 %v171
    %v208 = vunpack.c.l.b16 %v172
    %v209 = vunpack.c.h.b16 %v172
    %v210 = vunpack.c.l.b16 %v173
    %v211 = vunpack.c.h.b16 %v173
    %v212 = vunpack.c.l.b16 %v174
    %v213 = vunpack.c.h.b16 %v174
    %v214 = vunpack.c.l.b16 %v175
    %v215 = vunpack.c.h.b16 %v175
    %v216 = vunpack.c.l.b16 %v176
    %v217 = vunpack.c.h.b16 %v176
    %v218 = vunpack.c.l.b16 %v177
    %v219 = vunpack.c.h.b16 %v177
    %v220 = vunpack.c.l.b16 %v178
    %v221 = vunpack.c.h.b16 %v178
    %v222 = vunpack.c.l.b16 %v179
    %v223 = vunpack.c.h.b16 %v179
    %v224 = vunpack.c.l.b16 %v180
    %v225 = vunpack.c.h.b16 %v180
    %v226 = vunpack.c.l.b16 %v181
    %v227 = vunpack.c.h.b16 %v181
    %v228 = vunpack.c.l.b16 %v182
    %v229 = vunpack.c.h.b16 %v182
    %v230 = vunpack.c.l.b16 %v183
    %v231 = vunpack.c.h.b16 %v183
    %v232 = vunpack.c.l.b16 %v184
    %v233 = vunpack.c.h.b16 %v184
    %v234 = vpack.c.b16 %v204, %v202
    %v235 = vpack.c.b16 %v205, %v203
    %v236 = vpack.c.b16 %v208, %v206
    %v237 = vpack.c.b16 %v209, %v207
    %v238 = vpack.c.b16 %v212, %v210
    %v239 = vpack.c.b16 %v213, %v211
    %v240 = vpack.c.b16 %v216, %v214
    %v241 = vpack.c.b16 %v217, %v215
    %v242 = vpack.c.b16 %v220, %v218
    %v243 = vpack.c.b16 %v221, %v219
    %v244 = vpack.c.b16 %v224, %v222
    %v245 = vpack.c.b16 %v225, %v223
    %v246 = vpack.c.b16 %v228, %v226
    %v247 = vpack.c.b16 %v229, %v227
    %v248 = vpack.c.b16 %v232, %v230
    %v249 = vpack.c.b16 %v233, %v231
    %v267 = vlaneseq
    %v268 = vshrl.u32 %v267, 7
    %v269 = vsub.s32 0, %v268
    %v270 = vrot.slane %v185, %v269
    %v271 = vlaneseq
    %v272 = vshrl.u32 %v271, 7
    %v273 = vsub.s32 1, %v272
    %v274 = vrot.slane %v185, %v273
    %277 = vmatprep.subr.bf16.mxu0 %v249
    %278 = vmatpush1.bf16.msra.mxu0 %v248
    %279 = vmatprep.subr.bf16.mxu0 %v247
    %280 = vmatpush1.bf16.msra.mxu0 %v246
    %281 = vmatprep.subr.bf16.mxu0 %v245
    %282 = vmatpush1.bf16.msra.mxu0 %v244
    %283 = vmatprep.subr.bf16.mxu0 %v243
    %284 = vmatpush1.bf16.msra.mxu0 %v242
    %285 = vmatprep.subr.bf16.mxu0 %v241
    %286 = vmatpush1.bf16.msra.mxu0 %v240
    %287 = vmatprep.subr.bf16.mxu0 %v239
    %288 = vmatpush1.bf16.msra.mxu0 %v238
    %289 = vmatprep.subr.bf16.mxu0 %v237
    %290 = vmatpush1.bf16.msra.mxu0 %v236
    %291 = vmatprep.subr.bf16.mxu0 %v235
    %292 = vmatpush1.bf16.msra.mxu0 %v234
    %293 = vmatprep.subr.bf16.mxu0 0
    %294 = vmatpush2.bf16.msra.mxu0 0
    %295 = vmatprep.subr.bf16.mxu0 0
    %296 = vmatpush2.bf16.msra.mxu0 0
    %297 = vmatprep.subr.bf16.mxu0 0
    %298 = vmatpush2.bf16.msra.mxu0 0
    %299 = vmatprep.subr.bf16.mxu0 0
    %300 = vmatpush2.bf16.msra.mxu0 0
    %301 = vmatprep.subr.bf16.mxu0 0
    %302 = vmatpush2.bf16.msra.mxu0 0
    %303 = vmatprep.subr.bf16.mxu0 0
    %304 = vmatpush2.bf16.msra.mxu0 0
    %305 = vmatprep.subr.bf16.mxu0 0
    %306 = vmatpush2.bf16.msra.mxu0 0
    %307 = vmatprep.subr.bf16.mxu0 0
    %308 = vmatpush2.bf16.msra.mxu0 0
    %309 = vmatprep.mubr.bf16.mxu0 0
    %310 = vmatmul.mubr.bf16.gmra.mxu0 %v168
    %v311 = vpop.f32.mrf.mxu0
    %v312 = vadd.f32 %v270, %v311
    %v313 = vpop.f32.mrf.mxu0
    %v314 = vadd.f32 %v274, %v313
    %v315 = vpop.f32.mrf.mxu0
    %v316 = vpop.f32.mrf.mxu0
    %317 = vdwg.mxu0
    %v318 = vmax.f32 %v312, 0.0
    %v319 = vmax.f32 %v314, 0.0
    %v320 = vpack.c.bf16 %v318, %v318
    %v321 = vpack.c.bf16 %v319, %v319
    %v322 = vld [vmem:[#allocation10] sm:$0xf]
    %v323 = vld [vmem:[#allocation10 + $0x4] sm:$0xf]
    %v324 = vld [vmem:[#allocation10 + $0x8] sm:$0xf]
    %v325 = vld [vmem:[#allocation10 + $0xc] sm:$0xf]
    %v326 = vld [vmem:[#allocation10 + $0x10] sm:$0xf]
    %v327 = vld [vmem:[#allocation10 + $0x14] sm:$0xf]
    %v328 = vld [vmem:[#allocation10 + $0x18] sm:$0xf]
    %v329 = vld [vmem:[#allocation10 + $0x1c] sm:$0xf]
    %v330 = vld [vmem:[#allocation10 + $0x20] sm:$0xf]
    %v331 = vld [vmem:[#allocation10 + $0x24] sm:$0xf]
    %v332 = vld [vmem:[#allocation10 + $0x28] sm:$0xf]
    %v333 = vld [vmem:[#allocation10 + $0x2c] sm:$0xf]
    %v334 = vld [vmem:[#allocation10 + $0x30] sm:$0xf]
    %v335 = vld [vmem:[#allocation10 + $0x34] sm:$0xf]
    %v336 = vld [vmem:[#allocation10 + $0x38] sm:$0xf]
    %v337 = vld [vmem:[#allocation10 + $0x3c] sm:$0xf]
    %v338 = vld [vmem:[#allocation10 + $0x40] sm:$0xf]
    %v339 = vld [vmem:[#allocation10 + $0x44] sm:$0xf]
    %v340 = vld [vmem:[#allocation10 + $0x48] sm:$0xf]
    %v341 = vld [vmem:[#allocation10 + $0x4c] sm:$0xf]
    %v342 = vld [vmem:[#allocation10 + $0x50] sm:$0xf]
    %v343 = vld [vmem:[#allocation10 + $0x54] sm:$0xf]
    %v344 = vld [vmem:[#allocation10 + $0x58] sm:$0xf]
    %v345 = vld [vmem:[#allocation10 + $0x5c] sm:$0xf]
    %v346 = vld [vmem:[#allocation10 + $0x60] sm:$0xf]
    %v347 = vld [vmem:[#allocation10 + $0x64] sm:$0xf]
    %v348 = vld [vmem:[#allocation10 + $0x68] sm:$0xf]
    %v349 = vld [vmem:[#allocation10 + $0x6c] sm:$0xf]
    %v350 = vld [vmem:[#allocation10 + $0x70] sm:$0xf]
    %v351 = vld [vmem:[#allocation10 + $0x74] sm:$0xf]
    %v352 = vld [vmem:[#allocation10 + $0x78] sm:$0xf]
    %v353 = vld [vmem:[#allocation10 + $0x7c] sm:$0xf]
    %v354 = vld [vmem:[%s4 + $0xa] sm:$0x1]
    %v387 = vunpack.c.l.b16 %v322
    %v388 = vunpack.c.l.b16 %v323
    %v389 = vunpack.c.l.b16 %v324
    %v390 = vunpack.c.l.b16 %v325
    %v391 = vunpack.c.l.b16 %v326
    %v392 = vunpack.c.l.b16 %v327
    %v393 = vunpack.c.l.b16 %v328
    %v394 = vunpack.c.l.b16 %v329
    %v395 = vunpack.c.l.b16 %v330
    %v396 = vunpack.c.l.b16 %v331
    %v397 = vunpack.c.l.b16 %v332
    %v398 = vunpack.c.l.b16 %v333
    %v399 = vunpack.c.l.b16 %v334
    %v400 = vunpack.c.l.b16 %v335
    %v401 = vunpack.c.l.b16 %v336
    %v402 = vunpack.c.l.b16 %v337
    %v403 = vunpack.c.l.b16 %v338
    %v404 = vunpack.c.l.b16 %v339
    %v405 = vunpack.c.l.b16 %v340
    %v406 = vunpack.c.l.b16 %v341
    %v407 = vunpack.c.l.b16 %v342
    %v408 = vunpack.c.l.b16 %v343
    %v409 = vunpack.c.l.b16 %v344
    %v410 = vunpack.c.l.b16 %v345
    %v411 = vunpack.c.l.b16 %v346
    %v412 = vunpack.c.l.b16 %v347
    %v413 = vunpack.c.l.b16 %v348
    %v414 = vunpack.c.l.b16 %v349
    %v415 = vunpack.c.l.b16 %v350
    %v416 = vunpack.c.l.b16 %v351
    %v417 = vunpack.c.l.b16 %v352
    %v418 = vunpack.c.l.b16 %v353
    %v419 = vpack.c.b16 %v388, %v387
    %v420 = vpack.c.b16 %v390, %v389
    %v421 = vpack.c.b16 %v392, %v391
    %v422 = vpack.c.b16 %v394, %v393
    %v423 = vpack.c.b16 %v396, %v395
    %v424 = vpack.c.b16 %v398, %v397
    %v425 = vpack.c.b16 %v400, %v399
    %v426 = vpack.c.b16 %v402, %v401
    %v427 = vpack.c.b16 %v404, %v403
    %v428 = vpack.c.b16 %v406, %v405
    %v429 = vpack.c.b16 %v408, %v407
    %v430 = vpack.c.b16 %v410, %v409
    %v431 = vpack.c.b16 %v412, %v411
    %v432 = vpack.c.b16 %v414, %v413
    %v433 = vpack.c.b16 %v416, %v415
    %v434 = vpack.c.b16 %v418, %v417
    %451 = vmatprep.subr.bf16.mxu0 0
    %452 = vmatpush1.bf16.msra.mxu0 %v426
    %453 = vmatprep.subr.bf16.mxu0 0
    %454 = vmatpush1.bf16.msra.mxu0 %v425
    %455 = vmatprep.subr.bf16.mxu0 0
    %456 = vmatpush1.bf16.msra.mxu0 %v424
    %457 = vmatprep.subr.bf16.mxu0 0
    %458 = vmatpush1.bf16.msra.mxu0 %v423
    %459 = vmatprep.subr.bf16.mxu0 0
    %460 = vmatpush1.bf16.msra.mxu0 %v422
    %461 = vmatprep.subr.bf16.mxu0 0
    %462 = vmatpush1.bf16.msra.mxu0 %v421
    %463 = vmatprep.subr.bf16.mxu0 0
    %464 = vmatpush1.bf16.msra.mxu0 %v420
    %465 = vmatprep.subr.bf16.mxu0 0
    %466 = vmatpush1.bf16.msra.mxu0 %v419
    %467 = vmatprep.subr.bf16.mxu0 0
    %468 = vmatpush2.bf16.msra.mxu0 %v434
    %469 = vmatprep.subr.bf16.mxu0 0
    %470 = vmatpush2.bf16.msra.mxu0 %v433
    %471 = vmatprep.subr.bf16.mxu0 0
    %472 = vmatpush2.bf16.msra.mxu0 %v432
    %473 = vmatprep.subr.bf16.mxu0 0
    %474 = vmatpush2.bf16.msra.mxu0 %v431
    %475 = vmatprep.subr.bf16.mxu0 0
    %476 = vmatpush2.bf16.msra.mxu0 %v430
    %477 = vmatprep.subr.bf16.mxu0 0
    %478 = vmatpush2.bf16.msra.mxu0 %v429
    %479 = vmatprep.subr.bf16.mxu0 0
    %480 = vmatpush2.bf16.msra.mxu0 %v428
    %481 = vmatprep.subr.bf16.mxu0 0
    %482 = vmatpush2.bf16.msra.mxu0 %v427
    %483 = vmatprep.mubr.bf16.mxu0 %v321
    %484 = vmatmul.mubr.bf16.gmra.mxu0 %v320
    %v485 = vpop.f32.mrf.mxu0
    %v486 = vadd.f32 %v354, %v485
    %v487 = vpop.f32.mrf.mxu0
    %v488 = vpop.f32.mrf.mxu0
    %v489 = vpop.f32.mrf.mxu0
    %490 = vdwg.mxu0
    %492 = vset.pattern.permute.xlu0 0
    %493 = vperm.xlu0 %492, %v103
    %v494 = vpop.permute.xlu0 %493
    %496 = vst [vmem:[#allocation2] sm:$0xff] %v494
    %497 = vst [vmem:[#allocation4] sm:$0xff] %v164
    %498 = vst [vmem:[#allocation4 + $0x8] sm:$0xff] %v165
    %499 = vst [vmem:[#allocation3] sm:$0xff] 0.0
    loop: start=0, step=1, limit=16
    $region66: #{tpu_custom_call.1} parent=1 // loop_pre_header
      _
    $region67: #{tpu_custom_call.1} parent=1 // loop_header
      %s501 = sphi 0, %s505
      %p502 = scmp.ge.s32.totalorder %s501, 16
    $region68: #{tpu_custom_call.1} parent=1 // loop_header_branch
      %504 = sbr.rel (%p502) target = $region72
    $region69: #{tpu_custom_call.1} parent=1 // loop_body
      %s506 = sld [smem:[#allocation12 + %s501]]
      %s507 = sld [smem:[#allocation13 + %s501]]
      %s508 = scalar_lea.vmem [#allocation2], %s506
      %v509 = vld [vmem:[%s508] sm:$0x1]
      %s510 = scalar_lea.vmem [#allocation4], %s501
      %v511 = vld [vmem:[%s510] sm:$0x1]
      %v512 = vadd.f32 %v509, %v511
      %v513 = vmax.f32 %v512, 0.0
      %s514 = scalar_lea.vmem [#allocation3], %s507
      %v515 = vld [vmem:[%s514] sm:$0x1]
      %v516 = vadd.f32 %v515, %v513
      %517 = vst [vmem:[%s514] sm:$0x1] %v516
    $region70: #{tpu_custom_call.1} parent=1 // loop_footer
      %s505 = sadd.s32 1, %s501
    $region71: #{tpu_custom_call.1} parent=1 // loop_footer_branch
      %500 = sbr.rel target = $region67
    $region72: #{tpu_custom_call.1} parent=1 // loop_exit
      _
    %v518 = vld [vmem:[#allocation3] sm:$0xff]
    %v519 = vld [vmem:[#allocation2] sm:$0xff]
    %v520 = vadd.f32 %v518, %v519
    %v521 = vld [vmem:[%s4 + $0x4] sm:$0x1]
    %v522 = vlaneseq
    %v523 = vshrl.u32 %v522, 7
    %v524 = vsub.s32 0, %v523
    %v525 = vrot.slane %v521, %v524
    %v526 = vmul.f32 %v520, %v525
    %v527 = vld [vmem:[%s4 + $0x5] sm:$0x1]
    %v528 = vlaneseq
    %v529 = vshrl.u32 %v528, 7
    %v530 = vsub.s32 0, %v529
    %v531 = vrot.slane %v527, %v530
    %v532 = vadd.f32 %v526, %v531
    %v533 = vlaneseq
    %v534 = vshrl.u32 %v533, 7
    %v535 = vsub.s32 0, %v534
    %v536 = vrot.slane %v486, %v535
    %v537 = vadd.f32 %v532, %v536
    %538 = vst [vmem:[#allocation2] sm:$0xff] %v537
    %v539 = vld [vmem:[%s4 + $0x6] sm:$0x1]
    %v540 = vld [vmem:[%s4 + $0x7] sm:$0x1]
    %v541 = vld [vmem:[#allocation10 + $0x80] sm:$0xf]
    %v542 = vld [vmem:[#allocation10 + $0x84] sm:$0xf]
    %v543 = vld [vmem:[#allocation10 + $0x88] sm:$0xf]
    %v544 = vld [vmem:[#allocation10 + $0x8c] sm:$0xf]
    %v545 = vld [vmem:[#allocation10 + $0x90] sm:$0xf]
    %v546 = vld [vmem:[#allocation10 + $0x94] sm:$0xf]
    %v547 = vld [vmem:[#allocation10 + $0x98] sm:$0xf]
    %v548 = vld [vmem:[#allocation10 + $0x9c] sm:$0xf]
    %v549 = vld [vmem:[#allocation10 + $0xa0] sm:$0xf]
    %v550 = vld [vmem:[#allocation10 + $0xa4] sm:$0xf]
    %v551 = vld [vmem:[#allocation10 + $0xa8] sm:$0xf]
    %v552 = vld [vmem:[#allocation10 + $0xac] sm:$0xf]
    %v553 = vld [vmem:[#allocation10 + $0xb0] sm:$0xf]
    %v554 = vld [vmem:[#allocation10 + $0xb4] sm:$0xf]
    %v555 = vld [vmem:[#allocation10 + $0xb8] sm:$0xf]
    %v556 = vld [vmem:[#allocation10 + $0xbc] sm:$0xf]
    %v557 = vlaneseq
    %v558 = vshrl.u32 %v557, 7
    %v559 = vsub.s32 0, %v558
    %v560 = vrot.slane %v539, %v559
    %v577 = vunpack.c.l.b16 %v541
    %v578 = vunpack.c.l.b16 %v542
    %v579 = vunpack.c.l.b16 %v543
    %v580 = vunpack.c.l.b16 %v544
    %v581 = vunpack.c.l.b16 %v545
    %v582 = vunpack.c.l.b16 %v546
    %v583 = vunpack.c.l.b16 %v547
    %v584 = vunpack.c.l.b16 %v548
    %v585 = vunpack.c.l.b16 %v549
    %v586 = vunpack.c.l.b16 %v550
    %v587 = vunpack.c.l.b16 %v551
    %v588 = vunpack.c.l.b16 %v552
    %v589 = vunpack.c.l.b16 %v553
    %v590 = vunpack.c.l.b16 %v554
    %v591 = vunpack.c.l.b16 %v555
    %v592 = vunpack.c.l.b16 %v556
    %v593 = vpack.c.b16 %v578, %v577
    %v594 = vpack.c.b16 %v580, %v579
    %v595 = vpack.c.b16 %v582, %v581
    %v596 = vpack.c.b16 %v584, %v583
    %v597 = vpack.c.b16 %v586, %v585
    %v598 = vpack.c.b16 %v588, %v587
    %v599 = vpack.c.b16 %v590, %v589
    %v600 = vpack.c.b16 %v592, %v591
    %609 = vmatprep.subr.bf16.mxu0 0
    %610 = vmatpush1.bf16.msra.mxu0 %v600
    %611 = vmatprep.subr.bf16.mxu0 0
    %612 = vmatpush1.bf16.msra.mxu0 %v599
    %613 = vmatprep.subr.bf16.mxu0 0
    %614 = vmatpush1.bf16.msra.mxu0 %v598
    %615 = vmatprep.subr.bf16.mxu0 0
    %616 = vmatpush1.bf16.msra.mxu0 %v597
    %617 = vmatprep.subr.bf16.mxu0 0
    %618 = vmatpush1.bf16.msra.mxu0 %v596
    %619 = vmatprep.subr.bf16.mxu0 0
    %620 = vmatpush1.bf16.msra.mxu0 %v595
    %621 = vmatprep.subr.bf16.mxu0 0
    %622 = vmatpush1.bf16.msra.mxu0 %v594
    %623 = vmatprep.subr.bf16.mxu0 0
    %624 = vmatpush1.bf16.msra.mxu0 %v593
    %625 = vmatprep.subr.bf16.mxu0 0
    %626 = vmatpush2.bf16.msra.mxu0 0
    %627 = vmatprep.subr.bf16.mxu0 0
    %628 = vmatpush2.bf16.msra.mxu0 0
    %629 = vmatprep.subr.bf16.mxu0 0
    %630 = vmatpush2.bf16.msra.mxu0 0
    %631 = vmatprep.subr.bf16.mxu0 0
    %632 = vmatpush2.bf16.msra.mxu0 0
    %633 = vmatprep.subr.bf16.mxu0 0
    %634 = vmatpush2.bf16.msra.mxu0 0
    %635 = vmatprep.subr.bf16.mxu0 0
    %636 = vmatpush2.bf16.msra.mxu0 0
    %637 = vmatprep.subr.bf16.mxu0 0
    %638 = vmatpush2.bf16.msra.mxu0 0
    %639 = vmatprep.subr.bf16.mxu0 0
    %640 = vmatpush2.bf16.msra.mxu0 0
    %641 = vmatprep.mubr.bf16.mxu0 0
    %642 = vmatmul.mubr.bf16.gmra.mxu0 %v166
    %v643 = vpop.f32.mrf.mxu0
    %v644 = vadd.f32 %v560, %v643
    %v645 = vpop.f32.mrf.mxu0
    %v646 = vpop.f32.mrf.mxu0
    %v647 = vadd.f32 %v560, %v646
    %v648 = vpop.f32.mrf.mxu0
    %649 = vdwg.mxu0
    %650 = vst [vmem:[#allocation4] sm:$0xff] %v644
    %651 = vst [vmem:[#allocation4 + $0x8] sm:$0xff] %v647
    %652 = vst [vmem:[#allocation3] sm:$0xff] 0.0
    loop: start=0, step=1, limit=16
    $region73: #{tpu_custom_call.1} parent=1 // loop_pre_header
      _
    $region74: #{tpu_custom_call.1} parent=1 // loop_header
      %s654 = sphi 0, %s658
      %p655 = scmp.ge.s32.totalorder %s654, 16
    $region75: #{tpu_custom_call.1} parent=1 // loop_header_branch
      %657 = sbr.rel (%p655) target = $region79
    $region76: #{tpu_custom_call.1} parent=1 // loop_body
      %s659 = sld [smem:[#allocation12 + %s654]]
      %s660 = sld [smem:[#allocation13 + %s654]]
      %s661 = scalar_lea.vmem [#allocation2], %s659
      %v662 = vld [vmem:[%s661] sm:$0x1]
      %s663 = scalar_lea.vmem [#allocation4], %s654
      %v664 = vld [vmem:[%s663] sm:$0x1]
      %v665 = vadd.f32 %v662, %v664
      %v666 = vmax.f32 %v665, 0.0
      %s667 = scalar_lea.vmem [#allocation3], %s660
      %v668 = vld [vmem:[%s667] sm:$0x1]
      %v669 = vadd.f32 %v668, %v666
      %670 = vst [vmem:[%s667] sm:$0x1] %v669
    $region77: #{tpu_custom_call.1} parent=1 // loop_footer
      %s658 = sadd.s32 1, %s654
    $region78: #{tpu_custom_call.1} parent=1 // loop_footer_branch
      %653 = sbr.rel target = $region74
    $region79: #{tpu_custom_call.1} parent=1 // loop_exit
      _
    %v671 = vld [vmem:[#allocation2] sm:$0xff]
    %v672 = vld [vmem:[#allocation3] sm:$0xff]
    %v673 = vadd.f32 %v672, %v671
    %v674 = vpack.c.bf16 %v673, %v673
    %v675 = vld [vmem:[#allocation10 + $0xc0] sm:$0xf]
    %v676 = vld [vmem:[#allocation10 + $0xc4] sm:$0xf]
    %v677 = vld [vmem:[#allocation10 + $0xc8] sm:$0xf]
    %v678 = vld [vmem:[#allocation10 + $0xcc] sm:$0xf]
    %v679 = vld [vmem:[#allocation10 + $0xd0] sm:$0xf]
    %v680 = vld [vmem:[#allocation10 + $0xd4] sm:$0xf]
    %v681 = vld [vmem:[#allocation10 + $0xd8] sm:$0xf]
    %v682 = vld [vmem:[#allocation10 + $0xdc] sm:$0xf]
    %v683 = vld [vmem:[#allocation10 + $0xe0] sm:$0xf]
    %v684 = vld [vmem:[#allocation10 + $0xe4] sm:$0xf]
    %v685 = vld [vmem:[#allocation10 + $0xe8] sm:$0xf]
    %v686 = vld [vmem:[#allocation10 + $0xec] sm:$0xf]
    %v687 = vld [vmem:[#allocation10 + $0xf0] sm:$0xf]
    %v688 = vld [vmem:[#allocation10 + $0xf4] sm:$0xf]
    %v689 = vld [vmem:[#allocation10 + $0xf8] sm:$0xf]
    %v690 = vld [vmem:[#allocation10 + $0xfc] sm:$0xf]
    %v691 = vlaneseq
    %v692 = vshrl.u32 %v691, 7
    %v693 = vsub.s32 0, %v692
    %v694 = vrot.slane %v540, %v693
    %v711 = vunpack.c.l.b16 %v675
    %v712 = vunpack.c.l.b16 %v676
    %v713 = vunpack.c.l.b16 %v677
    %v714 = vunpack.c.l.b16 %v678
    %v715 = vunpack.c.l.b16 %v679
    %v716 = vunpack.c.l.b16 %v680
    %v717 = vunpack.c.l.b16 %v681
    %v718 = vunpack.c.l.b16 %v682
    %v719 = vunpack.c.l.b16 %v683
    %v720 = vunpack.c.l.b16 %v684
    %v721 = vunpack.c.l.b16 %v685
    %v722 = vunpack.c.l.b16 %v686
    %v723 = vunpack.c.l.b16 %v687
    %v724 = vunpack.c.l.b16 %v688
    %v725 = vunpack.c.l.b16 %v689
    %v726 = vunpack.c.l.b16 %v690
    %v727 = vpack.c.b16 %v712, %v711
    %v728 = vpack.c.b16 %v714, %v713
    %v729 = vpack.c.b16 %v716, %v715
    %v730 = vpack.c.b16 %v718, %v717
    %v731 = vpack.c.b16 %v720, %v719
    %v732 = vpack.c.b16 %v722, %v721
    %v733 = vpack.c.b16 %v724, %v723
    %v734 = vpack.c.b16 %v726, %v725
    %743 = vmatprep.subr.bf16.mxu0 0
    %744 = vmatpush1.bf16.msra.mxu0 %v734
    %745 = vmatprep.subr.bf16.mxu0 0
    %746 = vmatpush1.bf16.msra.mxu0 %v733
    %747 = vmatprep.subr.bf16.mxu0 0
    %748 = vmatpush1.bf16.msra.mxu0 %v732
    %749 = vmatprep.subr.bf16.mxu0 0
    %750 = vmatpush1.bf16.msra.mxu0 %v731
    %751 = vmatprep.subr.bf16.mxu0 0
    %752 = vmatpush1.bf16.msra.mxu0 %v730
    %753 = vmatprep.subr.bf16.mxu0 0
    %754 = vmatpush1.bf16.msra.mxu0 %v729
    %755 = vmatprep.subr.bf16.mxu0 0
    %756 = vmatpush1.bf16.msra.mxu0 %v728
    %757 = vmatprep.subr.bf16.mxu0 0
    %758 = vmatpush1.bf16.msra.mxu0 %v727
    %759 = vmatprep.subr.bf16.mxu0 0
    %760 = vmatpush2.bf16.msra.mxu0 0
    %761 = vmatprep.subr.bf16.mxu0 0
    %762 = vmatpush2.bf16.msra.mxu0 0
    %763 = vmatprep.subr.bf16.mxu0 0
    %764 = vmatpush2.bf16.msra.mxu0 0
    %765 = vmatprep.subr.bf16.mxu0 0
    %766 = vmatpush2.bf16.msra.mxu0 0
    %767 = vmatprep.subr.bf16.mxu0 0
    %768 = vmatpush2.bf16.msra.mxu0 0
    %769 = vmatprep.subr.bf16.mxu0 0
    %770 = vmatpush2.bf16.msra.mxu0 0
    %771 = vmatprep.subr.bf16.mxu0 0
    %772 = vmatpush2.bf16.msra.mxu0 0
    %773 = vmatprep.subr.bf16.mxu0 0
    %774 = vmatpush2.bf16.msra.mxu0 0
    %775 = vmatprep.mubr.bf16.mxu0 0
    %776 = vmatmul.mubr.bf16.gmra.mxu0 %v674
    %v777 = vpop.f32.mrf.mxu0
    %v778 = vadd.f32 %v694, %v777
    %v779 = vpop.f32.mrf.mxu0
    %v780 = vpop.f32.mrf.mxu0
    %v781 = vpop.f32.mrf.mxu0
    %782 = vdwg.mxu0
    %v783 = vadd.f32 %v778, %v536
    %784 = vst [vmem:[#allocation2] sm:$0xff] %v783
    %v785 = vld [vmem:[%s4 + $0x8] sm:$0x1]
    %v786 = vld [vmem:[%s4 + $0x9] sm:$0x1]
    %v787 = vld [vmem:[#allocation10 + $0x100] sm:$0xf]
    %v788 = vld [vmem:[#allocation10 + $0x104] sm:$0xf]
    %v789 = vld [vmem:[#allocation10 + $0x108] sm:$0xf]
    %v790 = vld [vmem:[#allocation10 + $0x10c] sm:$0xf]
    %v791 = vld [vmem:[#allocation10 + $0x110] sm:$0xf]
    %v792 = vld [vmem:[#allocation10 + $0x114] sm:$0xf]
    %v793 = vld [vmem:[#allocation10 + $0x118] sm:$0xf]
    %v794 = vld [vmem:[#allocation10 + $0x11c] sm:$0xf]
    %v795 = vld [vmem:[#allocation10 + $0x120] sm:$0xf]
    %v796 = vld [vmem:[#allocation10 + $0x124] sm:$0xf]
    %v797 = vld [vmem:[#allocation10 + $0x128] sm:$0xf]
    %v798 = vld [vmem:[#allocation10 + $0x12c] sm:$0xf]
    %v799 = vld [vmem:[#allocation10 + $0x130] sm:$0xf]
    %v800 = vld [vmem:[#allocation10 + $0x134] sm:$0xf]
    %v801 = vld [vmem:[#allocation10 + $0x138] sm:$0xf]
    %v802 = vld [vmem:[#allocation10 + $0x13c] sm:$0xf]
    %v803 = vlaneseq
    %v804 = vshrl.u32 %v803, 7
    %v805 = vsub.s32 0, %v804
    %v806 = vrot.slane %v785, %v805
    %v823 = vunpack.c.l.b16 %v787
    %v824 = vunpack.c.l.b16 %v788
    %v825 = vunpack.c.l.b16 %v789
    %v826 = vunpack.c.l.b16 %v790
    %v827 = vunpack.c.l.b16 %v791
    %v828 = vunpack.c.l.b16 %v792
    %v829 = vunpack.c.l.b16 %v793
    %v830 = vunpack.c.l.b16 %v794
    %v831 = vunpack.c.l.b16 %v795
    %v832 = vunpack.c.l.b16 %v796
    %v833 = vunpack.c.l.b16 %v797
    %v834 = vunpack.c.l.b16 %v798
    %v835 = vunpack.c.l.b16 %v799
    %v836 = vunpack.c.l.b16 %v800
    %v837 = vunpack.c.l.b16 %v801
    %v838 = vunpack.c.l.b16 %v802
    %v839 = vpack.c.b16 %v824, %v823
    %v840 = vpack.c.b16 %v826, %v825
    %v841 = vpack.c.b16 %v828, %v827
    %v842 = vpack.c.b16 %v830, %v829
    %v843 = vpack.c.b16 %v832, %v831
    %v844 = vpack.c.b16 %v834, %v833
    %v845 = vpack.c.b16 %v836, %v835
    %v846 = vpack.c.b16 %v838, %v837
    %855 = vmatprep.subr.bf16.mxu0 0
    %856 = vmatpush1.bf16.msra.mxu0 %v846
    %857 = vmatprep.subr.bf16.mxu0 0
    %858 = vmatpush1.bf16.msra.mxu0 %v845
    %859 = vmatprep.subr.bf16.mxu0 0
    %860 = vmatpush1.bf16.msra.mxu0 %v844
    %861 = vmatprep.subr.bf16.mxu0 0
    %862 = vmatpush1.bf16.msra.mxu0 %v843
    %863 = vmatprep.subr.bf16.mxu0 0
    %864 = vmatpush1.bf16.msra.mxu0 %v842
    %865 = vmatprep.subr.bf16.mxu0 0
    %866 = vmatpush1.bf16.msra.mxu0 %v841
    %867 = vmatprep.subr.bf16.mxu0 0
    %868 = vmatpush1.bf16.msra.mxu0 %v840
    %869 = vmatprep.subr.bf16.mxu0 0
    %870 = vmatpush1.bf16.msra.mxu0 %v839
    %871 = vmatprep.subr.bf16.mxu0 0
    %872 = vmatpush2.bf16.msra.mxu0 0
    %873 = vmatprep.subr.bf16.mxu0 0
    %874 = vmatpush2.bf16.msra.mxu0 0
    %875 = vmatprep.subr.bf16.mxu0 0
    %876 = vmatpush2.bf16.msra.mxu0 0
    %877 = vmatprep.subr.bf16.mxu0 0
    %878 = vmatpush2.bf16.msra.mxu0 0
    %879 = vmatprep.subr.bf16.mxu0 0
    %880 = vmatpush2.bf16.msra.mxu0 0
    %881 = vmatprep.subr.bf16.mxu0 0
    %882 = vmatpush2.bf16.msra.mxu0 0
    %883 = vmatprep.subr.bf16.mxu0 0
    %884 = vmatpush2.bf16.msra.mxu0 0
    %885 = vmatprep.subr.bf16.mxu0 0
    %886 = vmatpush2.bf16.msra.mxu0 0
    %887 = vmatprep.mubr.bf16.mxu0 0
    %888 = vmatmul.mubr.bf16.gmra.mxu0 %v166
    %v889 = vpop.f32.mrf.mxu0
    %v890 = vadd.f32 %v806, %v889
    %v891 = vpop.f32.mrf.mxu0
    %v892 = vpop.f32.mrf.mxu0
    %v893 = vadd.f32 %v806, %v892
    %v894 = vpop.f32.mrf.mxu0
    %895 = vdwg.mxu0
    %896 = vst [vmem:[#allocation4] sm:$0xff] %v890
    %897 = vst [vmem:[#allocation4 + $0x8] sm:$0xff] %v893
    %898 = vst [vmem:[#allocation3] sm:$0xff] 0.0
    loop: start=0, step=1, limit=16
    $region80: #{tpu_custom_call.1} parent=1 // loop_pre_header
      _
    $region81: #{tpu_custom_call.1} parent=1 // loop_header
      %s900 = sphi 0, %s904
      %p901 = scmp.ge.s32.totalorder %s900, 16
    $region82: #{tpu_custom_call.1} parent=1 // loop_header_branch
      %903 = sbr.rel (%p901) target = $region86
    $region83: #{tpu_custom_call.1} parent=1 // loop_body
      %s905 = sld [smem:[#allocation12 + %s900]]
      %s906 = sld [smem:[#allocation13 + %s900]]
      %s907 = scalar_lea.vmem [#allocation2], %s905
      %v908 = vld [vmem:[%s907] sm:$0x1]
      %s909 = scalar_lea.vmem [#allocation4], %s900
      %v910 = vld [vmem:[%s909] sm:$0x1]
      %v911 = vadd.f32 %v908, %v910
      %v912 = vmax.f32 %v911, 0.0
      %s913 = scalar_lea.vmem [#allocation3], %s906
      %v914 = vld [vmem:[%s913] sm:$0x1]
      %v915 = vadd.f32 %v914, %v912
      %916 = vst [vmem:[%s913] sm:$0x1] %v915
    $region84: #{tpu_custom_call.1} parent=1 // loop_footer
      %s904 = sadd.s32 1, %s900
    $region85: #{tpu_custom_call.1} parent=1 // loop_footer_branch
      %899 = sbr.rel target = $region81
    $region86: #{tpu_custom_call.1} parent=1 // loop_exit
      _
    %v917 = vld [vmem:[#allocation2] sm:$0xff]
    %v918 = vld [vmem:[#allocation3] sm:$0xff]
    %v919 = vadd.f32 %v918, %v917
    %v920 = vpack.c.bf16 %v919, %v919
    %v921 = vld [vmem:[#allocation10 + $0x140] sm:$0xf]
    %v922 = vld [vmem:[#allocation10 + $0x144] sm:$0xf]
    %v923 = vld [vmem:[#allocation10 + $0x148] sm:$0xf]
    %v924 = vld [vmem:[#allocation10 + $0x14c] sm:$0xf]
    %v925 = vld [vmem:[#allocation10 + $0x150] sm:$0xf]
    %v926 = vld [vmem:[#allocation10 + $0x154] sm:$0xf]
    %v927 = vld [vmem:[#allocation10 + $0x158] sm:$0xf]
    %v928 = vld [vmem:[#allocation10 + $0x15c] sm:$0xf]
    %v929 = vld [vmem:[#allocation10 + $0x160] sm:$0xf]
    %v930 = vld [vmem:[#allocation10 + $0x164] sm:$0xf]
    %v931 = vld [vmem:[#allocation10 + $0x168] sm:$0xf]
    %v932 = vld [vmem:[#allocation10 + $0x16c] sm:$0xf]
    %v933 = vld [vmem:[#allocation10 + $0x170] sm:$0xf]
    %v934 = vld [vmem:[#allocation10 + $0x174] sm:$0xf]
    %v935 = vld [vmem:[#allocation10 + $0x178] sm:$0xf]
    %v936 = vld [vmem:[#allocation10 + $0x17c] sm:$0xf]
    %v937 = vlaneseq
    %v938 = vshrl.u32 %v937, 7
    %v939 = vsub.s32 0, %v938
    %v940 = vrot.slane %v786, %v939
    %v957 = vunpack.c.l.b16 %v921
    %v958 = vunpack.c.l.b16 %v922
    %v959 = vunpack.c.l.b16 %v923
    %v960 = vunpack.c.l.b16 %v924
    %v961 = vunpack.c.l.b16 %v925
    %v962 = vunpack.c.l.b16 %v926
    %v963 = vunpack.c.l.b16 %v927
    %v964 = vunpack.c.l.b16 %v928
    %v965 = vunpack.c.l.b16 %v929
    %v966 = vunpack.c.l.b16 %v930
    %v967 = vunpack.c.l.b16 %v931
    %v968 = vunpack.c.l.b16 %v932
    %v969 = vunpack.c.l.b16 %v933
    %v970 = vunpack.c.l.b16 %v934
    %v971 = vunpack.c.l.b16 %v935
    %v972 = vunpack.c.l.b16 %v936
    %v973 = vpack.c.b16 %v958, %v957
    %v974 = vpack.c.b16 %v960, %v959
    %v975 = vpack.c.b16 %v962, %v961
    %v976 = vpack.c.b16 %v964, %v963
    %v977 = vpack.c.b16 %v966, %v965
    %v978 = vpack.c.b16 %v968, %v967
    %v979 = vpack.c.b16 %v970, %v969
    %v980 = vpack.c.b16 %v972, %v971
    %989 = vmatprep.subr.bf16.mxu0 0
    %990 = vmatpush1.bf16.msra.mxu0 %v980
    %991 = vmatprep.subr.bf16.mxu0 0
    %992 = vmatpush1.bf16.msra.mxu0 %v979
    %993 = vmatprep.subr.bf16.mxu0 0
    %994 = vmatpush1.bf16.msra.mxu0 %v978
    %995 = vmatprep.subr.bf16.mxu0 0
    %996 = vmatpush1.bf16.msra.mxu0 %v977
    %997 = vmatprep.subr.bf16.mxu0 0
    %998 = vmatpush1.bf16.msra.mxu0 %v976
    %999 = vmatprep.subr.bf16.mxu0 0
    %1000 = vmatpush1.bf16.msra.mxu0 %v975
    %1001 = vmatprep.subr.bf16.mxu0 0
    %1002 = vmatpush1.bf16.msra.mxu0 %v974
    %1003 = vmatprep.subr.bf16.mxu0 0
    %1004 = vmatpush1.bf16.msra.mxu0 %v973
    %1005 = vmatprep.subr.bf16.mxu0 0
    %1006 = vmatpush2.bf16.msra.mxu0 0
    %1007 = vmatprep.subr.bf16.mxu0 0
    %1008 = vmatpush2.bf16.msra.mxu0 0
    %1009 = vmatprep.subr.bf16.mxu0 0
    %1010 = vmatpush2.bf16.msra.mxu0 0
    %1011 = vmatprep.subr.bf16.mxu0 0
    %1012 = vmatpush2.bf16.msra.mxu0 0
    %1013 = vmatprep.subr.bf16.mxu0 0
    %1014 = vmatpush2.bf16.msra.mxu0 0
    %1015 = vmatprep.subr.bf16.mxu0 0
    %1016 = vmatpush2.bf16.msra.mxu0 0
    %1017 = vmatprep.subr.bf16.mxu0 0
    %1018 = vmatpush2.bf16.msra.mxu0 0
    %1019 = vmatprep.subr.bf16.mxu0 0
    %1020 = vmatpush2.bf16.msra.mxu0 0
    %1021 = vmatprep.mubr.bf16.mxu0 0
    %1022 = vmatmul.mubr.bf16.gmra.mxu0 %v920
    %v1023 = vpop.f32.mrf.mxu0
    %v1024 = vadd.f32 %v940, %v1023
    %v1025 = vpop.f32.mrf.mxu0
    %v1026 = vpop.f32.mrf.mxu0
    %v1027 = vpop.f32.mrf.mxu0
    %1028 = vdwg.mxu0
    %v1029 = vadd.f32 %v1024, %v536
    %1030 = vst [vmem:[#allocation2] sm:$0xff] %v1029
    loop: start=0, step=1, limit=16
    $region87: #{tpu_custom_call.1} parent=1 // loop_pre_header
      _
    $region88: #{tpu_custom_call.1} parent=1 // loop_header
      %s1032 = sphi 0, %s1036
      %p1033 = scmp.ge.s32.totalorder %s1032, 16
    $region89: #{tpu_custom_call.1} parent=1 // loop_header_branch
      %1035 = sbr.rel (%p1033) target = $region93
    $region90: #{tpu_custom_call.1} parent=1 // loop_body
      %s1037 = sld [smem:[#allocation12 + %s1032]]
      %s1038 = scalar_lea.vmem [#allocation2], %s1037
      %v1039 = vld [vmem:[%s1038] sm:$0x1]
      %s1040 = scalar_lea.vmem [#allocation5], %s1032
      %1041 = vst [vmem:[%s1040] sm:$0x1] %v1039
      %s1042 = sld [smem:[#allocation13 + %s1032]]
      %s1043 = scalar_lea.vmem [#allocation2], %s1042
      %v1044 = vld [vmem:[%s1043] sm:$0x1]
      %s1045 = scalar_lea.vmem [#allocation6], %s1032
      %1046 = vst [vmem:[%s1045] sm:$0x1] %v1044
    $region91: #{tpu_custom_call.1} parent=1 // loop_footer
      %s1036 = sadd.s32 1, %s1032
    $region92: #{tpu_custom_call.1} parent=1 // loop_footer_branch
      %1031 = sbr.rel target = $region88
    $region93: #{tpu_custom_call.1} parent=1 // loop_exit
      _
    %v1047 = vld [vmem:[#allocation5] sm:$0xff]
    %v1048 = vld [vmem:[#allocation5 + $0x8] sm:$0xff]
    %v1049 = vld [vmem:[#allocation6] sm:$0xff]
    %v1050 = vld [vmem:[#allocation6 + $0x8] sm:$0xff]
    %v1051 = vpack.c.bf16 %v1048, %v1047
    %v1052 = vpack.c.bf16 %v1050, %v1049
    %v1053 = vld [vmem:[#allocation10 + $0x180] sm:$0xf]
    %v1054 = vld [vmem:[#allocation10 + $0x184] sm:$0xf]
    %v1055 = vld [vmem:[#allocation10 + $0x188] sm:$0xf]
    %v1056 = vld [vmem:[#allocation10 + $0x18c] sm:$0xf]
    %v1057 = vld [vmem:[#allocation10 + $0x190] sm:$0xf]
    %v1058 = vld [vmem:[#allocation10 + $0x194] sm:$0xf]
    %v1059 = vld [vmem:[#allocation10 + $0x198] sm:$0xf]
    %v1060 = vld [vmem:[#allocation10 + $0x19c] sm:$0xf]
    %v1061 = vld [vmem:[#allocation10 + $0x1a0] sm:$0xf]
    %v1062 = vld [vmem:[#allocation10 + $0x1a4] sm:$0xf]
    %v1063 = vld [vmem:[#allocation10 + $0x1a8] sm:$0xf]
    %v1064 = vld [vmem:[#allocation10 + $0x1ac] sm:$0xf]
    %v1065 = vld [vmem:[#allocation10 + $0x1b0] sm:$0xf]
    %v1066 = vld [vmem:[#allocation10 + $0x1b4] sm:$0xf]
    %v1067 = vld [vmem:[#allocation10 + $0x1b8] sm:$0xf]
    %v1068 = vld [vmem:[#allocation10 + $0x1bc] sm:$0xf]
    %v1069 = vld [vmem:[#allocation10 + $0x1c0] sm:$0xf]
    %v1070 = vld [vmem:[#allocation10 + $0x1c4] sm:$0xf]
    %v1071 = vld [vmem:[#allocation10 + $0x1c8] sm:$0xf]
    %v1072 = vld [vmem:[#allocation10 + $0x1cc] sm:$0xf]
    %v1073 = vld [vmem:[#allocation10 + $0x1d0] sm:$0xf]
    %v1074 = vld [vmem:[#allocation10 + $0x1d4] sm:$0xf]
    %v1075 = vld [vmem:[#allocation10 + $0x1d8] sm:$0xf]
    %v1076 = vld [vmem:[#allocation10 + $0x1dc] sm:$0xf]
    %v1077 = vld [vmem:[#allocation10 + $0x1e0] sm:$0xf]
    %v1078 = vld [vmem:[#allocation10 + $0x1e4] sm:$0xf]
    %v1079 = vld [vmem:[#allocation10 + $0x1e8] sm:$0xf]
    %v1080 = vld [vmem:[#allocation10 + $0x1ec] sm:$0xf]
    %v1081 = vld [vmem:[#allocation10 + $0x1f0] sm:$0xf]
    %v1082 = vld [vmem:[#allocation10 + $0x1f4] sm:$0xf]
    %v1083 = vld [vmem:[#allocation10 + $0x1f8] sm:$0xf]
    %v1084 = vld [vmem:[#allocation10 + $0x1fc] sm:$0xf]
    %v1085 = vld [vmem:[%s4 + $0xd] sm:$0x1]
    %v1086 = vlaneseq
    %v1087 = vshrl.u32 %v1086, 7
    %v1088 = vsub.s32 0, %v1087
    %v1089 = vrot.slane %v1085, %v1088
    %v1090 = vmul.f32 %v129, %v1089
    %v1091 = vmul.f32 %v134, %v1089
    %v1124 = vunpack.c.l.b16 %v1053
    %v1125 = vunpack.c.l.b16 %v1054
    %v1126 = vunpack.c.l.b16 %v1055
    %v1127 = vunpack.c.l.b16 %v1056
    %v1128 = vunpack.c.l.b16 %v1057
    %v1129 = vunpack.c.l.b16 %v1058
    %v1130 = vunpack.c.l.b16 %v1059
    %v1131 = vunpack.c.l.b16 %v1060
    %v1132 = vunpack.c.l.b16 %v1061
    %v1133 = vunpack.c.l.b16 %v1062
    %v1134 = vunpack.c.l.b16 %v1063
    %v1135 = vunpack.c.l.b16 %v1064
    %v1136 = vunpack.c.l.b16 %v1065
    %v1137 = vunpack.c.l.b16 %v1066
    %v1138 = vunpack.c.l.b16 %v1067
    %v1139 = vunpack.c.l.b16 %v1068
    %v1140 = vunpack.c.l.b16 %v1069
    %v1141 = vunpack.c.l.b16 %v1070
    %v1142 = vunpack.c.l.b16 %v1071
    %v1143 = vunpack.c.l.b16 %v1072
    %v1144 = vunpack.c.l.b16 %v1073
    %v1145 = vunpack.c.l.b16 %v1074
    %v1146 = vunpack.c.l.b16 %v1075
    %v1147 = vunpack.c.l.b16 %v1076
    %v1148 = vunpack.c.l.b16 %v1077
    %v1149 = vunpack.c.l.b16 %v1078
    %v1150 = vunpack.c.l.b16 %v1079
    %v1151 = vunpack.c.l.b16 %v1080
    %v1152 = vunpack.c.l.b16 %v1081
    %v1153 = vunpack.c.l.b16 %v1082
    %v1154 = vunpack.c.l.b16 %v1083
    %v1155 = vunpack.c.l.b16 %v1084
    %v1156 = vpack.c.b16 %v1125, %v1124
    %v1157 = vpack.c.b16 %v1127, %v1126
    %v1158 = vpack.c.b16 %v1129, %v1128
    %v1159 = vpack.c.b16 %v1131, %v1130
    %v1160 = vpack.c.b16 %v1133, %v1132
    %v1161 = vpack.c.b16 %v1135, %v1134
    %v1162 = vpack.c.b16 %v1137, %v1136
    %v1163 = vpack.c.b16 %v1139, %v1138
    %v1164 = vpack.c.b16 %v1141, %v1140
    %v1165 = vpack.c.b16 %v1143, %v1142
    %v1166 = vpack.c.b16 %v1145, %v1144
    %v1167 = vpack.c.b16 %v1147, %v1146
    %v1168 = vpack.c.b16 %v1149, %v1148
    %v1169 = vpack.c.b16 %v1151, %v1150
    %v1170 = vpack.c.b16 %v1153, %v1152
    %v1171 = vpack.c.b16 %v1155, %v1154
    %1188 = vmatprep.subr.bf16.mxu0 0
    %1189 = vmatpush1.bf16.msra.mxu0 %v1163
    %1190 = vmatprep.subr.bf16.mxu0 0
    %1191 = vmatpush1.bf16.msra.mxu0 %v1162
    %1192 = vmatprep.subr.bf16.mxu0 0
    %1193 = vmatpush1.bf16.msra.mxu0 %v1161
    %1194 = vmatprep.subr.bf16.mxu0 0
    %1195 = vmatpush1.bf16.msra.mxu0 %v1160
    %1196 = vmatprep.subr.bf16.mxu0 0
    %1197 = vmatpush1.bf16.msra.mxu0 %v1159
    %1198 = vmatprep.subr.bf16.mxu0 0
    %1199 = vmatpush1.bf16.msra.mxu0 %v1158
    %1200 = vmatprep.subr.bf16.mxu0 0
    %1201 = vmatpush1.bf16.msra.mxu0 %v1157
    %1202 = vmatprep.subr.bf16.mxu0 0
    %1203 = vmatpush1.bf16.msra.mxu0 %v1156
    %1204 = vmatprep.subr.bf16.mxu0 0
    %1205 = vmatpush2.bf16.msra.mxu0 %v1171
    %1206 = vmatprep.subr.bf16.mxu0 0
    %1207 = vmatpush2.bf16.msra.mxu0 %v1170
    %1208 = vmatprep.subr.bf16.mxu0 0
    %1209 = vmatpush2.bf16.msra.mxu0 %v1169
    %1210 = vmatprep.subr.bf16.mxu0 0
    %1211 = vmatpush2.bf16.msra.mxu0 %v1168
    %1212 = vmatprep.subr.bf16.mxu0 0
    %1213 = vmatpush2.bf16.msra.mxu0 %v1167
    %1214 = vmatprep.subr.bf16.mxu0 0
    %1215 = vmatpush2.bf16.msra.mxu0 %v1166
    %1216 = vmatprep.subr.bf16.mxu0 0
    %1217 = vmatpush2.bf16.msra.mxu0 %v1165
    %1218 = vmatprep.subr.bf16.mxu0 0
    %1219 = vmatpush2.bf16.msra.mxu0 %v1164
    %1220 = vmatprep.mubr.bf16.mxu0 %v1052
    %1221 = vmatmul.mubr.bf16.gmra.mxu0 %v1051
    %v1222 = vpop.f32.mrf.mxu0
    %v1223 = vadd.f32 %v1090, %v1222
    %v1224 = vpop.f32.mrf.mxu0
    %v1225 = vpop.f32.mrf.mxu0
    %v1226 = vadd.f32 %v1091, %v1225
    %v1227 = vpop.f32.mrf.mxu0
    %1228 = vdwg.mxu0
    %v1229 = vld [vmem:[%s4 + $0xb] sm:$0x1]
    %v1230 = vlaneseq
    %v1231 = vshrl.u32 %v1230, 7
    %v1232 = vsub.s32 0, %v1231
    %v1233 = vrot.slane %v1229, %v1232
    %v1234 = vadd.f32 %v1223, %v1233
    %v1235 = vadd.f32 %v1226, %v1233
    %v1236 = vld [vmem:[#allocation10 + $0x200] sm:$0xf]
    %v1237 = vld [vmem:[#allocation10 + $0x204] sm:$0xf]
    %v1238 = vld [vmem:[#allocation10 + $0x208] sm:$0xf]
    %v1239 = vld [vmem:[#allocation10 + $0x20c] sm:$0xf]
    %v1240 = vld [vmem:[#allocation10 + $0x210] sm:$0xf]
    %v1241 = vld [vmem:[#allocation10 + $0x214] sm:$0xf]
    %v1242 = vld [vmem:[#allocation10 + $0x218] sm:$0xf]
    %v1243 = vld [vmem:[#allocation10 + $0x21c] sm:$0xf]
    %v1244 = vld [vmem:[#allocation10 + $0x220] sm:$0xf]
    %v1245 = vld [vmem:[#allocation10 + $0x224] sm:$0xf]
    %v1246 = vld [vmem:[#allocation10 + $0x228] sm:$0xf]
    %v1247 = vld [vmem:[#allocation10 + $0x22c] sm:$0xf]
    %v1248 = vld [vmem:[#allocation10 + $0x230] sm:$0xf]
    %v1249 = vld [vmem:[#allocation10 + $0x234] sm:$0xf]
    %v1250 = vld [vmem:[#allocation10 + $0x238] sm:$0xf]
    %v1251 = vld [vmem:[#allocation10 + $0x23c] sm:$0xf]
    %v1252 = vld [vmem:[#allocation10 + $0x240] sm:$0xf]
    %v1253 = vld [vmem:[#allocation10 + $0x244] sm:$0xf]
    %v1254 = vld [vmem:[#allocation10 + $0x248] sm:$0xf]
    %v1255 = vld [vmem:[#allocation10 + $0x24c] sm:$0xf]
    %v1256 = vld [vmem:[#allocation10 + $0x250] sm:$0xf]
    %v1257 = vld [vmem:[#allocation10 + $0x254] sm:$0xf]
    %v1258 = vld [vmem:[#allocation10 + $0x258] sm:$0xf]
    %v1259 = vld [vmem:[#allocation10 + $0x25c] sm:$0xf]
    %v1260 = vld [vmem:[#allocation10 + $0x260] sm:$0xf]
    %v1261 = vld [vmem:[#allocation10 + $0x264] sm:$0xf]
    %v1262 = vld [vmem:[#allocation10 + $0x268] sm:$0xf]
    %v1263 = vld [vmem:[#allocation10 + $0x26c] sm:$0xf]
    %v1264 = vld [vmem:[#allocation10 + $0x270] sm:$0xf]
    %v1265 = vld [vmem:[#allocation10 + $0x274] sm:$0xf]
    %v1266 = vld [vmem:[#allocation10 + $0x278] sm:$0xf]
    %v1267 = vld [vmem:[#allocation10 + $0x27c] sm:$0xf]
    %v1268 = vld [vmem:[%s4 + $0xe] sm:$0x1]
    %v1269 = vlaneseq
    %v1270 = vshrl.u32 %v1269, 7
    %v1271 = vsub.s32 0, %v1270
    %v1272 = vrot.slane %v1268, %v1271
    %v1273 = vmul.f32 %v129, %v1272
    %v1274 = vmul.f32 %v134, %v1272
    %v1307 = vunpack.c.l.b16 %v1236
    %v1308 = vunpack.c.l.b16 %v1237
    %v1309 = vunpack.c.l.b16 %v1238
    %v1310 = vunpack.c.l.b16 %v1239
    %v1311 = vunpack.c.l.b16 %v1240
    %v1312 = vunpack.c.l.b16 %v1241
    %v1313 = vunpack.c.l.b16 %v1242
    %v1314 = vunpack.c.l.b16 %v1243
    %v1315 = vunpack.c.l.b16 %v1244
    %v1316 = vunpack.c.l.b16 %v1245
    %v1317 = vunpack.c.l.b16 %v1246
    %v1318 = vunpack.c.l.b16 %v1247
    %v1319 = vunpack.c.l.b16 %v1248
    %v1320 = vunpack.c.l.b16 %v1249
    %v1321 = vunpack.c.l.b16 %v1250
    %v1322 = vunpack.c.l.b16 %v1251
    %v1323 = vunpack.c.l.b16 %v1252
    %v1324 = vunpack.c.l.b16 %v1253
    %v1325 = vunpack.c.l.b16 %v1254
    %v1326 = vunpack.c.l.b16 %v1255
    %v1327 = vunpack.c.l.b16 %v1256
    %v1328 = vunpack.c.l.b16 %v1257
    %v1329 = vunpack.c.l.b16 %v1258
    %v1330 = vunpack.c.l.b16 %v1259
    %v1331 = vunpack.c.l.b16 %v1260
    %v1332 = vunpack.c.l.b16 %v1261
    %v1333 = vunpack.c.l.b16 %v1262
    %v1334 = vunpack.c.l.b16 %v1263
    %v1335 = vunpack.c.l.b16 %v1264
    %v1336 = vunpack.c.l.b16 %v1265
    %v1337 = vunpack.c.l.b16 %v1266
    %v1338 = vunpack.c.l.b16 %v1267
    %v1339 = vpack.c.b16 %v1308, %v1307
    %v1340 = vpack.c.b16 %v1310, %v1309
    %v1341 = vpack.c.b16 %v1312, %v1311
    %v1342 = vpack.c.b16 %v1314, %v1313
    %v1343 = vpack.c.b16 %v1316, %v1315
    %v1344 = vpack.c.b16 %v1318, %v1317
    %v1345 = vpack.c.b16 %v1320, %v1319
    %v1346 = vpack.c.b16 %v1322, %v1321
    %v1347 = vpack.c.b16 %v1324, %v1323
    %v1348 = vpack.c.b16 %v1326, %v1325
    %v1349 = vpack.c.b16 %v1328, %v1327
    %v1350 = vpack.c.b16 %v1330, %v1329
    %v1351 = vpack.c.b16 %v1332, %v1331
    %v1352 = vpack.c.b16 %v1334, %v1333
    %v1353 = vpack.c.b16 %v1336, %v1335
    %v1354 = vpack.c.b16 %v1338, %v1337
    %1371 = vmatprep.subr.bf16.mxu0 0
    %1372 = vmatpush1.bf16.msra.mxu0 %v1346
    %1373 = vmatprep.subr.bf16.mxu0 0
    %1374 = vmatpush1.bf16.msra.mxu0 %v1345
    %1375 = vmatprep.subr.bf16.mxu0 0
    %1376 = vmatpush1.bf16.msra.mxu0 %v1344
    %1377 = vmatprep.subr.bf16.mxu0 0
    %1378 = vmatpush1.bf16.msra.mxu0 %v1343
    %1379 = vmatprep.subr.bf16.mxu0 0
    %1380 = vmatpush1.bf16.msra.mxu0 %v1342
    %1381 = vmatprep.subr.bf16.mxu0 0
    %1382 = vmatpush1.bf16.msra.mxu0 %v1341
    %1383 = vmatprep.subr.bf16.mxu0 0
    %1384 = vmatpush1.bf16.msra.mxu0 %v1340
    %1385 = vmatprep.subr.bf16.mxu0 0
    %1386 = vmatpush1.bf16.msra.mxu0 %v1339
    %1387 = vmatprep.subr.bf16.mxu0 0
    %1388 = vmatpush2.bf16.msra.mxu0 %v1354
    %1389 = vmatprep.subr.bf16.mxu0 0
    %1390 = vmatpush2.bf16.msra.mxu0 %v1353
    %1391 = vmatprep.subr.bf16.mxu0 0
    %1392 = vmatpush2.bf16.msra.mxu0 %v1352
    %1393 = vmatprep.subr.bf16.mxu0 0
    %1394 = vmatpush2.bf16.msra.mxu0 %v1351
    %1395 = vmatprep.subr.bf16.mxu0 0
    %1396 = vmatpush2.bf16.msra.mxu0 %v1350
    %1397 = vmatprep.subr.bf16.mxu0 0
    %1398 = vmatpush2.bf16.msra.mxu0 %v1349
    %1399 = vmatprep.subr.bf16.mxu0 0
    %1400 = vmatpush2.bf16.msra.mxu0 %v1348
    %1401 = vmatprep.subr.bf16.mxu0 0
    %1402 = vmatpush2.bf16.msra.mxu0 %v1347
    %1403 = vmatprep.mubr.bf16.mxu0 %v1052
    %1404 = vmatmul.mubr.bf16.gmra.mxu0 %v1051
    %v1405 = vpop.f32.mrf.mxu0
    %v1406 = vadd.f32 %v1273, %v1405
    %v1407 = vpop.f32.mrf.mxu0
    %v1408 = vpop.f32.mrf.mxu0
    %v1409 = vadd.f32 %v1274, %v1408
    %v1410 = vpop.f32.mrf.mxu0
    %1411 = vdwg.mxu0
    %v1412 = vld [vmem:[%s4 + $0xc] sm:$0x1]
    %v1413 = vlaneseq
    %v1414 = vshrl.u32 %v1413, 7
    %v1415 = vsub.s32 0, %v1414
    %v1416 = vrot.slane %v1412, %v1415
    %v1417 = vadd.f32 %v1406, %v1416
    %v1418 = vadd.f32 %v1409, %v1416
    %v1419 = vld [vmem:[%s4 + $0xf] sm:$0x1]
    %v1420 = vlaneseq
    %v1421 = vshrl.u32 %v1420, 7
    %v1422 = vsub.s32 0, %v1421
    %v1423 = vrot.slane %v1419, %v1422
    %v1424 = vmul.f32 %v1047, %v1423
    %v1425 = vmul.f32 %v1048, %v1423
    %1426 = vadd.xlane.f32.xlu0 %v1424
    %v1427 = vpop.xlane.xlu0 %1426
    %1428 = vadd.xlane.f32.xlu0 %v1425
    %v1429 = vpop.xlane.xlu0 %1428
    %v1430 = vld [vmem:[%s4 + $0x10] sm:$0x1]
    %v1431 = vlaneseq
    %v1432 = vshrl.u32 %v1431, 7
    %v1433 = vsub.s32 0, %v1432
    %v1434 = vrot.slane %v1430, %v1433
    %v1435 = vmul.f32 %v1049, %v1434
    %v1436 = vmul.f32 %v1050, %v1434
    %1437 = vadd.xlane.f32.xlu0 %v1435
    %v1438 = vpop.xlane.xlu0 %1437
    %1439 = vadd.xlane.f32.xlu0 %v1436
    %v1440 = vpop.xlane.xlu0 %1439
    %v1441 = vadd.f32 %v1427, %v1438
    %v1442 = vadd.f32 %v1429, %v1440
    %s1443 = sld [smem:[#allocation15 + $0x1]]
    %v1444 = vstv %s1443
    %v1445 = vmul.f32 %v106, %v1444
    %v1446 = vmul.f32 %v107, %v1444
    %v1447 = vadd.f32 %v1441, %v1445
    %v1448 = vadd.f32 %v1442, %v1446
    %s1449 = sld [smem:[#allocation15 + $0x2]]
    %v1450 = vstv %s1449
    %v1451 = vadd.f32 %v1447, %v1450
    %v1452 = vadd.f32 %v1448, %v1450
    %v1453 = vmax.f32 %v1234, 0.0
    %v1454 = vmax.f32 %v1235, 0.0
    %v1455 = vmax.f32 %v1417, 0.0
    %v1456 = vmax.f32 %v1418, 0.0
    %v1457 = vmax.f32 %v1451, 0.0
    %v1458 = vmax.f32 %v1452, 0.0
    %v1459 = vld [vmem:[%s4 + $0x11] sm:$0x1]
    %v1460 = vlaneseq
    %v1461 = vshrl.u32 %v1460, 7
    %v1462 = vsub.s32 0, %v1461
    %v1463 = vrot.slane %v1459, %v1462
    %v1464 = vmul.f32 %v1453, %v1463
    %v1465 = vmul.f32 %v1454, %v1463
    %1466 = vadd.xlane.f32.xlu0 %v1464
    %v1467 = vpop.xlane.xlu0 %1466
    %1468 = vadd.xlane.f32.xlu0 %v1465
    %v1469 = vpop.xlane.xlu0 %1468
    %v1470 = vld [vmem:[%s4 + $0x12] sm:$0x1]
    %v1471 = vlaneseq
    %v1472 = vshrl.u32 %v1471, 7
    %v1473 = vsub.s32 0, %v1472
    %v1474 = vrot.slane %v1470, %v1473
    %v1475 = vmul.f32 %v1455, %v1474
    %v1476 = vmul.f32 %v1456, %v1474
    %1477 = vadd.xlane.f32.xlu0 %v1475
    %v1478 = vpop.xlane.xlu0 %1477
    %1479 = vadd.xlane.f32.xlu0 %v1476
    %v1480 = vpop.xlane.xlu0 %1479
    %v1481 = vadd.f32 %v1467, %v1478
    %v1482 = vadd.f32 %v1469, %v1480
    %s1483 = sld [smem:[#allocation15 + $0x3]]
    %v1484 = vstv %s1483
    %v1485 = vmul.f32 %v1457, %v1484
    %v1486 = vmul.f32 %v1458, %v1484
    %v1487 = vadd.f32 %v1481, %v1485
    %v1488 = vadd.f32 %v1482, %v1486
    %s1489 = sld [smem:[#allocation15 + $0x4]]
    %v1490 = vstv %s1489
    %v1491 = vadd.f32 %v1487, %v1490
    %v1492 = vadd.f32 %v1488, %v1490
    %vm1493 = vcmask 7168
    %1494 = vst.msk [vmem:[%s11] sm:$0xff] %vm1493, %v1491
    %1495 = vst.msk [vmem:[%s11 + $0x8] sm:$0xff] %vm1493, %v1492
    // Predicated region
    $region94: #{tpu_custom_call.1} parent=1 // pred_check
      _
    $region95: #{tpu_custom_call.1} parent=1 // pred_check_branch
      %1497 = sbr.rel (0) target = $region97
    $region96: #{tpu_custom_call.1} parent=1 // pred_region
      _
    $region97: #{tpu_custom_call.1} parent=1 // pred_fallthru
      _
    // Predicated region
    $region98: #{tpu_custom_call.1} parent=1 // pred_check
      _
    $region99: #{tpu_custom_call.1} parent=1 // pred_check_branch
      %1499 = sbr.rel (0) target = $region101
    $region100: #{tpu_custom_call.1} parent=1 // pred_region
      _
    $region101: #{tpu_custom_call.1} parent=1 // pred_fallthru
      _
    %1500 = vsyncpa [#allocation8], 1
    %1501 = vsyncpa [#allocation11], 1
    %1502 = vsyncpa [#allocation9], 1
    %1503 = vsyncpa [#allocation14], 1

</llo_original>
